<compile_context>
chip_gen: v6e
topology: v6e:2x2x1
jax: 0.10.0
libtpu: 0.0.40
codegen_flags: <defaults>
</compile_context>

<pallas_src>
import math

import jax
import jax.numpy as jnp
from jax import lax
from jax.experimental import pallas as pl
from jax.experimental.pallas import tpu as pltpu

# ---- hyper-parameters from the PyTorch module __init__ ----
NTOK = 256       # ADC_channel (vocab / output dim)
E = 32           # Embedding_dim / d_model
H = 2            # nhead
DH = E // H      # per-head dim
FF = 128         # dim_feedforward
NLAYERS = 2
LN_EPS = 1e-5
NEG_INF = -1e30

_VMEM = pl.BlockSpec(memory_space=pltpu.MemorySpace.VMEM)


# ------------------------------------------------------------------ kernel --

def _layer_norm(x, w, b):
    mu = jnp.mean(x, axis=-1, keepdims=True)
    var = jnp.mean(jnp.square(x - mu), axis=-1, keepdims=True)
    return (x - mu) * lax.rsqrt(var + LN_EPS) * w + b


def fused_forward_kernel(x_ref, bias_ref,
                         wqkv_ref, bqkv_ref, wo_ref, bo_ref,
                         ln1w_ref, ln1b_ref, w1_ref, b1_ref,
                         w2_ref, b2_ref, ln2w_ref, ln2b_ref,
                         lin_w_ref, lin_b_ref, out_ref):
    """Whole forward: NLAYERS post-norm encoder layers + final NTOK linear."""
    x = x_ref[...]                       # [N, E] activation (kept as a value)
    bias = bias_ref[...]                 # [N, N] block-diagonal additive mask
    scale = 1.0 / math.sqrt(DH)

    for li in range(NLAYERS):            # static unroll (NLAYERS = 2)
        # ---- multi-head self-attention (fused QKV projection) ----
        qkv = (jnp.dot(x, wqkv_ref[li], preferred_element_type=jnp.float32)
               + bqkv_ref[li])                                   # [N, 3E]
        wo = wo_ref[li]                                          # [E, E]
        attn = None
        for h in range(H):               # static unroll (H = 2)
            qo = h * DH
            q = qkv[:, qo:qo + DH] * scale                       # [N, DH] (scale on Q)
            k = qkv[:, E + qo:E + qo + DH]                       # [N, DH]
            v = qkv[:, 2 * E + qo:2 * E + qo + DH]               # [N, DH]
            # scores over ALL tokens, masked down to the per-seq-index block
            s = lax.dot_general(q, k, (((1,), (1,)), ((), ())),
                                preferred_element_type=jnp.float32) + bias
            s = s - jnp.max(s, axis=-1, keepdims=True)
            p = jnp.exp(s)
            p = p / jnp.sum(p, axis=-1, keepdims=True)
            oh = jnp.dot(p, v, preferred_element_type=jnp.float32)      # [N, DH]
            # per-head slice of the output projection == concat(heads) @ W_o
            ph = jnp.dot(oh, wo[qo:qo + DH, :],
                         preferred_element_type=jnp.float32)            # [N, E]
            attn = ph if attn is None else attn + ph
        attn = attn + bo_ref[li]

        # ---- residual + norm1 (post-norm, PyTorch default norm_first=False) --
        x = _layer_norm(x + attn, ln1w_ref[li], ln1b_ref[li])

        # ---- feed-forward: linear1 -> relu -> linear2 ----
        hdn = jnp.maximum(
            jnp.dot(x, w1_ref[li], preferred_element_type=jnp.float32)
            + b1_ref[li], 0.0)
        ff = (jnp.dot(hdn, w2_ref[li], preferred_element_type=jnp.float32)
              + b2_ref[li])

        # ---- residual + norm2 ----
        x = _layer_norm(x + ff, ln2w_ref[li], ln2b_ref[li])

    # ---- final classifier: lane-dense [N, 256] output (unmasked vst) ----
    out_ref[...] = (jnp.dot(x, lin_w_ref[...], preferred_element_type=jnp.float32)
                    + lin_b_ref[...])


# ----------------------------------------------------------------- wrapper --

def fused_forward(x, bias, params):
    N = x.shape[0]
    return pl.pallas_call(
        fused_forward_kernel,
        out_shape=jax.ShapeDtypeStruct((N, NTOK), jnp.float32),
        in_specs=[_VMEM] * 16,
        out_specs=_VMEM,
    )(x, bias,
      params['wqkv'], params['bqkv'], params['wo'], params['bo'],
      params['ln1w'], params['ln1b'], params['w1'], params['b1'],
      params['w2'], params['b2'], params['ln2w'], params['ln2b'],
      params['lin_w'], params['lin_b'])


@jax.jit
def transformer_forward(src, params):
    """src: int32 [seq_len, batch]. Returns float32 [seq_len, NTOK, batch]."""
    S, Bn = src.shape
    # embedding lookup (XLA gather) * sqrt(d_model)
    emb = params['embedding'][src] * math.sqrt(E)                 # [S, Bn, E]
    # PositionalEncoding: pe[:, :, :x.size(2)] -> indexed by the BATCH position
    pos = jnp.arange(Bn, dtype=jnp.float32)[:, None]
    div = jnp.exp(jnp.arange(0, E, 2, dtype=jnp.float32) * (-math.log(10000.0) / E))
    pe = jnp.zeros((Bn, E), jnp.float32)
    pe = pe.at[:, 0::2].set(jnp.sin(pos * div))
    pe = pe.at[:, 1::2].set(jnp.cos(pos * div))
    # TODO(synk): nn.Dropout layers are identity in eval mode; not implemented.
    x = (emb + pe[None, :, :]).reshape(S * Bn, E)                 # row = s*Bn + bn
    # block-diagonal additive mask: rows sharing the same seq index attend
    ids = jnp.arange(S * Bn, dtype=jnp.int32) // Bn
    bias = jnp.where(ids[:, None] == ids[None, :], 0.0, NEG_INF).astype(jnp.float32)
    out = fused_forward(x, bias, params)                          # [S*Bn, NTOK]
    out = out.reshape(S, Bn, NTOK)
    return jnp.transpose(out, (0, 2, 1))                          # [S, NTOK, Bn]


# ----------------------------------------------------- pure-JAX reference ----

def _ref_ln(x, w, b):
    mu = jnp.mean(x, axis=-1, keepdims=True)
    var = jnp.mean(jnp.square(x - mu), axis=-1, keepdims=True)
    return (x - mu) * lax.rsqrt(var + LN_EPS) * w + b


def _ref_encoder_layer(x, p, li):
    A, B, Ed = x.shape
    qkv = x @ p['wqkv'][li] + p['bqkv'][li]
    q, k, v = qkv[..., :Ed], qkv[..., Ed:2 * Ed], qkv[..., 2 * Ed:]
    qh = q.reshape(A, B, H, DH)
    kh = k.reshape(A, B, H, DH)
    vh = v.reshape(A, B, H, DH)
    s = jnp.einsum('abhd,cbhd->bhac', qh, kh) / math.sqrt(DH)
    pr = jax.nn.softmax(s, axis=-1)
    o = jnp.einsum('bhac,cbhd->abhd', pr, vh).reshape(A, B, Ed)
    o = o @ p['wo'][li] + p['bo'][li]
    x = _ref_ln(x + o, p['ln1w'][li], p['ln1b'][li])
    ff = jnp.maximum(x @ p['w1'][li] + p['b1'][li], 0.0) @ p['w2'][li] + p['b2'][li]
    return _ref_ln(x + ff, p['ln2w'][li], p['ln2b'][li])


def reference_forward(src, params):
    S, Bn = src.shape
    emb = params['embedding'][src.T] * math.sqrt(E)               # [Bn, S, E]
    pos = jnp.arange(Bn, dtype=jnp.float32)[:, None]
    div = jnp.exp(jnp.arange(0, E, 2, dtype=jnp.float32) * (-math.log(10000.0) / E))
    pe = jnp.zeros((Bn, E), jnp.float32)
    pe = pe.at[:, 0::2].set(jnp.sin(pos * div))
    pe = pe.at[:, 1::2].set(jnp.cos(pos * div))
    x = emb + pe[:, None, :]                                      # PE by batch pos
    for li in range(NLAYERS):
        x = _ref_encoder_layer(x, params, li)
    out = x @ params['lin_w'] + params['lin_b']                   # [Bn, S, NTOK]
    return jnp.transpose(out, (1, 2, 0))                          # [S, NTOK, Bn]


# ----------------------------------------------------------------- params ----

def init_params(key):
    keys = jax.random.split(key, 2 + NLAYERS * 7)

    def u(k, shape, scale=0.1):
        return jax.random.uniform(k, shape, jnp.float32, -scale, scale)

    layers = []
    for li in range(NLAYERS):
        b = 2 + li * 7
        layers.append(dict(
            wqkv=u(keys[b + 0], (E, 3 * E)),     # in_proj_weight.T
            bqkv=u(keys[b + 1], (1, 3 * E)),
            wo=u(keys[b + 2], (E, E)),           # out_proj.weight.T
            bo=jnp.zeros((1, E), jnp.float32),
            ln1w=jnp.ones((1, E), jnp.float32),
            ln1b=jnp.zeros((1, E), jnp.float32),
            w1=u(keys[b + 3], (E, FF)),          # linear1.weight.T
            b1=u(keys[b + 4], (1, FF)),
            w2=u(keys[b + 5], (FF, E)),          # linear2.weight.T
            b2=u(keys[b + 6], (1, E)),
            ln2w=jnp.ones((1, E), jnp.float32),
            ln2b=jnp.zeros((1, E), jnp.float32),
        ))
    params = {
        'embedding': u(keys[0], (NTOK, E)),
        'lin_w': u(keys[1], (E, NTOK)),          # self.linear.weight.T
        'lin_b': jnp.zeros((1, NTOK), jnp.float32),
    }
    # stack per-layer tensors along a leading [NLAYERS] axis for the fused kernel
    for name in layers[0]:
        params[name] = jnp.stack([lp[name] for lp in layers])
    return params


if __name__ == "__main__":
    key = jax.random.PRNGKey(0)
    pkey, skey = jax.random.split(key)
    params = init_params(pkey)

    SEQ, BATCH = 8, 4
    src = jax.random.randint(skey, (SEQ, BATCH), 0, NTOK, dtype=jnp.int32)

    out = jax.block_until_ready(transformer_forward(src, params))
    assert out.shape == (SEQ, NTOK, BATCH), out.shape

    ref = reference_forward(src, params)
    max_err = float(jnp.max(jnp.abs(out - ref)))
    assert max_err < 1e-3, f"mismatch vs reference: {max_err}"

    print("KERNEL_OK")
</pallas_src>

<mosaic_0001>
module attributes {stable_mosaic.version = 11 : i64} {
  func.func @fused_forward_kernel(%arg0: memref<32x32xf32, #tpu.memory_space<vmem>>, %arg1: memref<32x32xf32, #tpu.memory_space<vmem>>, %arg2: memref<2x32x96xf32, #tpu.memory_space<vmem>>, %arg3: memref<2x1x96xf32, #tpu.memory_space<vmem>>, %arg4: memref<2x32x32xf32, #tpu.memory_space<vmem>>, %arg5: memref<2x1x32xf32, #tpu.memory_space<vmem>>, %arg6: memref<2x1x32xf32, #tpu.memory_space<vmem>>, %arg7: memref<2x1x32xf32, #tpu.memory_space<vmem>>, %arg8: memref<2x32x128xf32, #tpu.memory_space<vmem>>, %arg9: memref<2x1x128xf32, #tpu.memory_space<vmem>>, %arg10: memref<2x128x32xf32, #tpu.memory_space<vmem>>, %arg11: memref<2x1x32xf32, #tpu.memory_space<vmem>>, %arg12: memref<2x1x32xf32, #tpu.memory_space<vmem>>, %arg13: memref<2x1x32xf32, #tpu.memory_space<vmem>>, %arg14: memref<32x256xf32, #tpu.memory_space<vmem>>, %arg15: memref<1x256xf32, #tpu.memory_space<vmem>>, %arg16: memref<32x256xf32, #tpu.memory_space<vmem>>) attributes {dimension_semantics = [], scalar_prefetch = 0 : i64, scratch_operands = 0 : i64, tpu.core_type = #tpu.core_type<tc>} {
    %c0 = arith.constant 0 : index
    %c0_0 = arith.constant 0 : index
    %0 = vector.load %arg0[%c0, %c0_0] : memref<32x32xf32, #tpu.memory_space<vmem>>, vector<32x32xf32>
    %c0_1 = arith.constant 0 : index
    %c0_2 = arith.constant 0 : index
    %1 = vector.load %arg1[%c0_1, %c0_2] : memref<32x32xf32, #tpu.memory_space<vmem>>, vector<32x32xf32>
    %c0_3 = arith.constant 0 : index
    %c0_4 = arith.constant 0 : index
    %c0_5 = arith.constant 0 : index
    %2 = vector.load %arg2[%c0_3, %c0_4, %c0_5] : memref<2x32x96xf32, #tpu.memory_space<vmem>>, vector<1x32x96xf32>
    %3 = vector.shape_cast %2 : vector<1x32x96xf32> to vector<32x96xf32>
    %cst = arith.constant dense<0.000000e+00> : vector<32x96xf32>
    %4 = tpu.matmul %0, %3, %cst {dimension_numbers = #tpu.dot_dimension_numbers<[1], [0], [0], [1], [0, 0, 1, 1], [], []>} : vector<32x32xf32>, vector<32x96xf32>, vector<32x96xf32> -> vector<32x96xf32>
    %c0_6 = arith.constant 0 : index
    %c0_7 = arith.constant 0 : index
    %c0_8 = arith.constant 0 : index
    %5 = vector.load %arg3[%c0_6, %c0_7, %c0_8] : memref<2x1x96xf32, #tpu.memory_space<vmem>>, vector<1x1x96xf32>
    %6 = vector.shape_cast %5 : vector<1x1x96xf32> to vector<1x96xf32>
    %7 = vector.broadcast %6 : vector<1x96xf32> to vector<32x96xf32>
    %8 = arith.addf %4, %7 : vector<32x96xf32>
    %c0_9 = arith.constant 0 : index
    %c0_10 = arith.constant 0 : index
    %c0_11 = arith.constant 0 : index
    %9 = vector.load %arg4[%c0_9, %c0_10, %c0_11] : memref<2x32x32xf32, #tpu.memory_space<vmem>>, vector<1x32x32xf32>
    %10 = vector.shape_cast %9 : vector<1x32x32xf32> to vector<32x32xf32>
    %11 = vector.extract_strided_slice %8 {offsets = [0, 0], sizes = [32, 16], strides = [1, 1]} : vector<32x96xf32> to vector<32x16xf32>
    %cst_12 = arith.constant 2.500000e-01 : f32
    %12 = vector.broadcast %cst_12 : f32 to vector<32x16xf32>
    %13 = arith.mulf %11, %12 : vector<32x16xf32>
    %14 = vector.extract_strided_slice %8 {offsets = [0, 32], sizes = [32, 16], strides = [1, 1]} : vector<32x96xf32> to vector<32x16xf32>
    %15 = vector.extract_strided_slice %8 {offsets = [0, 64], sizes = [32, 16], strides = [1, 1]} : vector<32x96xf32> to vector<32x16xf32>
    %cst_13 = arith.constant dense<0.000000e+00> : vector<32x32xf32>
    %16 = tpu.matmul %13, %14, %cst_13 {dimension_numbers = #tpu.dot_dimension_numbers<[1], [1], [0], [0], [0, 0, 1, 0], [], []>} : vector<32x16xf32>, vector<32x16xf32>, vector<32x32xf32> -> vector<32x32xf32>
    %17 = arith.addf %16, %1 : vector<32x32xf32>
    %cst_14 = arith.constant dense<0xFF800000> : vector<32xf32>
    %18 = vector.multi_reduction <maximumf>, %17, %cst_14 [1] : vector<32x32xf32> to vector<32xf32>
    %19 = vector.shape_cast %18 : vector<32xf32> to vector<32x1xf32>
    %20 = vector.broadcast %19 : vector<32x1xf32> to vector<32x32xf32>
    %21 = arith.subf %17, %20 : vector<32x32xf32>
    %22 = math.exp %21 : vector<32x32xf32>
    %cst_15 = arith.constant dense<0.000000e+00> : vector<32xf32>
    %23 = vector.multi_reduction <add>, %22, %cst_15 [1] : vector<32x32xf32> to vector<32xf32>
    %24 = vector.shape_cast %23 : vector<32xf32> to vector<32x1xf32>
    %25 = vector.broadcast %24 : vector<32x1xf32> to vector<32x32xf32>
    %26 = arith.divf %22, %25 : vector<32x32xf32>
    %cst_16 = arith.constant dense<0.000000e+00> : vector<32x16xf32>
    %27 = tpu.matmul %26, %15, %cst_16 {dimension_numbers = #tpu.dot_dimension_numbers<[1], [0], [0], [1], [0, 0, 1, 1], [], []>} : vector<32x32xf32>, vector<32x16xf32>, vector<32x16xf32> -> vector<32x16xf32>
    %28 = vector.extract_strided_slice %10 {offsets = [0, 0], sizes = [16, 32], strides = [1, 1]} : vector<32x32xf32> to vector<16x32xf32>
    %cst_17 = arith.constant dense<0.000000e+00> : vector<32x32xf32>
    %29 = tpu.matmul %27, %28, %cst_17 {dimension_numbers = #tpu.dot_dimension_numbers<[1], [0], [0], [1], [0, 0, 1, 1], [], []>} : vector<32x16xf32>, vector<16x32xf32>, vector<32x32xf32> -> vector<32x32xf32>
    %30 = vector.extract_strided_slice %8 {offsets = [0, 16], sizes = [32, 16], strides = [1, 1]} : vector<32x96xf32> to vector<32x16xf32>
    %cst_18 = arith.constant 2.500000e-01 : f32
    %31 = vector.broadcast %cst_18 : f32 to vector<32x16xf32>
    %32 = arith.mulf %30, %31 : vector<32x16xf32>
    %33 = vector.extract_strided_slice %8 {offsets = [0, 48], sizes = [32, 16], strides = [1, 1]} : vector<32x96xf32> to vector<32x16xf32>
    %34 = vector.extract_strided_slice %8 {offsets = [0, 80], sizes = [32, 16], strides = [1, 1]} : vector<32x96xf32> to vector<32x16xf32>
    %cst_19 = arith.constant dense<0.000000e+00> : vector<32x32xf32>
    %35 = tpu.matmul %32, %33, %cst_19 {dimension_numbers = #tpu.dot_dimension_numbers<[1], [1], [0], [0], [0, 0, 1, 0], [], []>} : vector<32x16xf32>, vector<32x16xf32>, vector<32x32xf32> -> vector<32x32xf32>
    %36 = arith.addf %35, %1 : vector<32x32xf32>
    %cst_20 = arith.constant dense<0xFF800000> : vector<32xf32>
    %37 = vector.multi_reduction <maximumf>, %36, %cst_20 [1] : vector<32x32xf32> to vector<32xf32>
    %38 = vector.shape_cast %37 : vector<32xf32> to vector<32x1xf32>
    %39 = vector.broadcast %38 : vector<32x1xf32> to vector<32x32xf32>
    %40 = arith.subf %36, %39 : vector<32x32xf32>
    %41 = math.exp %40 : vector<32x32xf32>
    %cst_21 = arith.constant dense<0.000000e+00> : vector<32xf32>
    %42 = vector.multi_reduction <add>, %41, %cst_21 [1] : vector<32x32xf32> to vector<32xf32>
    %43 = vector.shape_cast %42 : vector<32xf32> to vector<32x1xf32>
    %44 = vector.broadcast %43 : vector<32x1xf32> to vector<32x32xf32>
    %45 = arith.divf %41, %44 : vector<32x32xf32>
    %cst_22 = arith.constant dense<0.000000e+00> : vector<32x16xf32>
    %46 = tpu.matmul %45, %34, %cst_22 {dimension_numbers = #tpu.dot_dimension_numbers<[1], [0], [0], [1], [0, 0, 1, 1], [], []>} : vector<32x32xf32>, vector<32x16xf32>, vector<32x16xf32> -> vector<32x16xf32>
    %47 = vector.extract_strided_slice %10 {offsets = [16, 0], sizes = [16, 32], strides = [1, 1]} : vector<32x32xf32> to vector<16x32xf32>
    %cst_23 = arith.constant dense<0.000000e+00> : vector<32x32xf32>
    %48 = tpu.matmul %46, %47, %cst_23 {dimension_numbers = #tpu.dot_dimension_numbers<[1], [0], [0], [1], [0, 0, 1, 1], [], []>} : vector<32x16xf32>, vector<16x32xf32>, vector<32x32xf32> -> vector<32x32xf32>
    %49 = arith.addf %29, %48 : vector<32x32xf32>
    %c0_24 = arith.constant 0 : index
    %c0_25 = arith.constant 0 : index
    %c0_26 = arith.constant 0 : index
    %50 = vector.load %arg5[%c0_24, %c0_25, %c0_26] : memref<2x1x32xf32, #tpu.memory_space<vmem>>, vector<1x1x32xf32>
    %51 = vector.shape_cast %50 : vector<1x1x32xf32> to vector<1x32xf32>
    %52 = vector.broadcast %51 : vector<1x32xf32> to vector<32x32xf32>
    %53 = arith.addf %49, %52 : vector<32x32xf32>
    %54 = arith.addf %0, %53 : vector<32x32xf32>
    %c0_27 = arith.constant 0 : index
    %c0_28 = arith.constant 0 : index
    %c0_29 = arith.constant 0 : index
    %55 = vector.load %arg6[%c0_27, %c0_28, %c0_29] : memref<2x1x32xf32, #tpu.memory_space<vmem>>, vector<1x1x32xf32>
    %56 = vector.shape_cast %55 : vector<1x1x32xf32> to vector<1x32xf32>
    %c0_30 = arith.constant 0 : index
    %c0_31 = arith.constant 0 : index
    %c0_32 = arith.constant 0 : index
    %57 = vector.load %arg7[%c0_30, %c0_31, %c0_32] : memref<2x1x32xf32, #tpu.memory_space<vmem>>, vector<1x1x32xf32>
    %58 = vector.shape_cast %57 : vector<1x1x32xf32> to vector<1x32xf32>
    %cst_33 = arith.constant dense<0.000000e+00> : vector<32xf32>
    %59 = vector.multi_reduction <add>, %54, %cst_33 [1] : vector<32x32xf32> to vector<32xf32>
    %60 = vector.shape_cast %59 : vector<32xf32> to vector<32x1xf32>
    %cst_34 = arith.constant 3.200000e+01 : f32
    %61 = vector.broadcast %cst_34 : f32 to vector<32x1xf32>
    %62 = arith.divf %60, %61 : vector<32x1xf32>
    %63 = vector.broadcast %62 : vector<32x1xf32> to vector<32x32xf32>
    %64 = arith.subf %54, %63 : vector<32x32xf32>
    %65 = arith.mulf %64, %64 : vector<32x32xf32>
    %cst_35 = arith.constant dense<0.000000e+00> : vector<32xf32>
    %66 = vector.multi_reduction <add>, %65, %cst_35 [1] : vector<32x32xf32> to vector<32xf32>
    %67 = vector.shape_cast %66 : vector<32xf32> to vector<32x1xf32>
    %cst_36 = arith.constant 3.200000e+01 : f32
    %68 = vector.broadcast %cst_36 : f32 to vector<32x1xf32>
    %69 = arith.divf %67, %68 : vector<32x1xf32>
    %70 = vector.broadcast %62 : vector<32x1xf32> to vector<32x32xf32>
    %71 = arith.subf %54, %70 : vector<32x32xf32>
    %cst_37 = arith.constant 9.99999974E-6 : f32
    %72 = vector.broadcast %cst_37 : f32 to vector<32x1xf32>
    %73 = arith.addf %69, %72 : vector<32x1xf32>
    %74 = math.rsqrt %73 : vector<32x1xf32>
    %75 = vector.broadcast %74 : vector<32x1xf32> to vector<32x32xf32>
    %76 = arith.mulf %71, %75 : vector<32x32xf32>
    %77 = vector.broadcast %56 : vector<1x32xf32> to vector<32x32xf32>
    %78 = arith.mulf %76, %77 : vector<32x32xf32>
    %79 = vector.broadcast %58 : vector<1x32xf32> to vector<32x32xf32>
    %80 = arith.addf %78, %79 : vector<32x32xf32>
    %c0_38 = arith.constant 0 : index
    %c0_39 = arith.constant 0 : index
    %c0_40 = arith.constant 0 : index
    %81 = vector.load %arg8[%c0_38, %c0_39, %c0_40] : memref<2x32x128xf32, #tpu.memory_space<vmem>>, vector<1x32x128xf32>
    %82 = vector.shape_cast %81 : vector<1x32x128xf32> to vector<32x128xf32>
    %cst_41 = arith.constant dense<0.000000e+00> : vector<32x128xf32>
    %83 = tpu.matmul %80, %82, %cst_41 {dimension_numbers = #tpu.dot_dimension_numbers<[1], [0], [0], [1], [0, 0, 1, 1], [], []>} : vector<32x32xf32>, vector<32x128xf32>, vector<32x128xf32> -> vector<32x128xf32>
    %c0_42 = arith.constant 0 : index
    %c0_43 = arith.constant 0 : index
    %c0_44 = arith.constant 0 : index
    %84 = vector.load %arg9[%c0_42, %c0_43, %c0_44] : memref<2x1x128xf32, #tpu.memory_space<vmem>>, vector<1x1x128xf32>
    %85 = vector.shape_cast %84 : vector<1x1x128xf32> to vector<1x128xf32>
    %86 = vector.broadcast %85 : vector<1x128xf32> to vector<32x128xf32>
    %87 = arith.addf %83, %86 : vector<32x128xf32>
    %cst_45 = arith.constant 0.000000e+00 : f32
    %88 = vector.broadcast %cst_45 : f32 to vector<32x128xf32>
    %89 = arith.maximumf %87, %88 : vector<32x128xf32>
    %c0_46 = arith.constant 0 : index
    %c0_47 = arith.constant 0 : index
    %c0_48 = arith.constant 0 : index
    %90 = vector.load %arg10[%c0_46, %c0_47, %c0_48] : memref<2x128x32xf32, #tpu.memory_space<vmem>>, vector<1x128x32xf32>
    %91 = vector.shape_cast %90 : vector<1x128x32xf32> to vector<128x32xf32>
    %cst_49 = arith.constant dense<0.000000e+00> : vector<32x32xf32>
    %92 = tpu.matmul %89, %91, %cst_49 {dimension_numbers = #tpu.dot_dimension_numbers<[1], [0], [0], [1], [0, 0, 1, 1], [], []>} : vector<32x128xf32>, vector<128x32xf32>, vector<32x32xf32> -> vector<32x32xf32>
    %c0_50 = arith.constant 0 : index
    %c0_51 = arith.constant 0 : index
    %c0_52 = arith.constant 0 : index
    %93 = vector.load %arg11[%c0_50, %c0_51, %c0_52] : memref<2x1x32xf32, #tpu.memory_space<vmem>>, vector<1x1x32xf32>
    %94 = vector.shape_cast %93 : vector<1x1x32xf32> to vector<1x32xf32>
    %95 = vector.broadcast %94 : vector<1x32xf32> to vector<32x32xf32>
    %96 = arith.addf %92, %95 : vector<32x32xf32>
    %97 = arith.addf %80, %96 : vector<32x32xf32>
    %c0_53 = arith.constant 0 : index
    %c0_54 = arith.constant 0 : index
    %c0_55 = arith.constant 0 : index
    %98 = vector.load %arg12[%c0_53, %c0_54, %c0_55] : memref<2x1x32xf32, #tpu.memory_space<vmem>>, vector<1x1x32xf32>
    %99 = vector.shape_cast %98 : vector<1x1x32xf32> to vector<1x32xf32>
    %c0_56 = arith.constant 0 : index
    %c0_57 = arith.constant 0 : index
    %c0_58 = arith.constant 0 : index
    %100 = vector.load %arg13[%c0_56, %c0_57, %c0_58] : memref<2x1x32xf32, #tpu.memory_space<vmem>>, vector<1x1x32xf32>
    %101 = vector.shape_cast %100 : vector<1x1x32xf32> to vector<1x32xf32>
    %cst_59 = arith.constant dense<0.000000e+00> : vector<32xf32>
    %102 = vector.multi_reduction <add>, %97, %cst_59 [1] : vector<32x32xf32> to vector<32xf32>
    %103 = vector.shape_cast %102 : vector<32xf32> to vector<32x1xf32>
    %cst_60 = arith.constant 3.200000e+01 : f32
    %104 = vector.broadcast %cst_60 : f32 to vector<32x1xf32>
    %105 = arith.divf %103, %104 : vector<32x1xf32>
    %106 = vector.broadcast %105 : vector<32x1xf32> to vector<32x32xf32>
    %107 = arith.subf %97, %106 : vector<32x32xf32>
    %108 = arith.mulf %107, %107 : vector<32x32xf32>
    %cst_61 = arith.constant dense<0.000000e+00> : vector<32xf32>
    %109 = vector.multi_reduction <add>, %108, %cst_61 [1] : vector<32x32xf32> to vector<32xf32>
    %110 = vector.shape_cast %109 : vector<32xf32> to vector<32x1xf32>
    %cst_62 = arith.constant 3.200000e+01 : f32
    %111 = vector.broadcast %cst_62 : f32 to vector<32x1xf32>
    %112 = arith.divf %110, %111 : vector<32x1xf32>
    %113 = vector.broadcast %105 : vector<32x1xf32> to vector<32x32xf32>
    %114 = arith.subf %97, %113 : vector<32x32xf32>
    %cst_63 = arith.constant 9.99999974E-6 : f32
    %115 = vector.broadcast %cst_63 : f32 to vector<32x1xf32>
    %116 = arith.addf %112, %115 : vector<32x1xf32>
    %117 = math.rsqrt %116 : vector<32x1xf32>
    %118 = vector.broadcast %117 : vector<32x1xf32> to vector<32x32xf32>
    %119 = arith.mulf %114, %118 : vector<32x32xf32>
    %120 = vector.broadcast %99 : vector<1x32xf32> to vector<32x32xf32>
    %121 = arith.mulf %119, %120 : vector<32x32xf32>
    %122 = vector.broadcast %101 : vector<1x32xf32> to vector<32x32xf32>
    %123 = arith.addf %121, %122 : vector<32x32xf32>
    %c1 = arith.constant 1 : index
    %c0_64 = arith.constant 0 : index
    %c0_65 = arith.constant 0 : index
    %124 = vector.load %arg2[%c1, %c0_64, %c0_65] : memref<2x32x96xf32, #tpu.memory_space<vmem>>, vector<1x32x96xf32>
    %125 = vector.shape_cast %124 : vector<1x32x96xf32> to vector<32x96xf32>
    %cst_66 = arith.constant dense<0.000000e+00> : vector<32x96xf32>
    %126 = tpu.matmul %123, %125, %cst_66 {dimension_numbers = #tpu.dot_dimension_numbers<[1], [0], [0], [1], [0, 0, 1, 1], [], []>} : vector<32x32xf32>, vector<32x96xf32>, vector<32x96xf32> -> vector<32x96xf32>
    %c1_67 = arith.constant 1 : index
    %c0_68 = arith.constant 0 : index
    %c0_69 = arith.constant 0 : index
    %127 = vector.load %arg3[%c1_67, %c0_68, %c0_69] : memref<2x1x96xf32, #tpu.memory_space<vmem>>, vector<1x1x96xf32>
    %128 = vector.shape_cast %127 : vector<1x1x96xf32> to vector<1x96xf32>
    %129 = vector.broadcast %128 : vector<1x96xf32> to vector<32x96xf32>
    %130 = arith.addf %126, %129 : vector<32x96xf32>
    %c1_70 = arith.constant 1 : index
    %c0_71 = arith.constant 0 : index
    %c0_72 = arith.constant 0 : index
    %131 = vector.load %arg4[%c1_70, %c0_71, %c0_72] : memref<2x32x32xf32, #tpu.memory_space<vmem>>, vector<1x32x32xf32>
    %132 = vector.shape_cast %131 : vector<1x32x32xf32> to vector<32x32xf32>
    %133 = vector.extract_strided_slice %130 {offsets = [0, 0], sizes = [32, 16], strides = [1, 1]} : vector<32x96xf32> to vector<32x16xf32>
    %cst_73 = arith.constant 2.500000e-01 : f32
    %134 = vector.broadcast %cst_73 : f32 to vector<32x16xf32>
    %135 = arith.mulf %133, %134 : vector<32x16xf32>
    %136 = vector.extract_strided_slice %130 {offsets = [0, 32], sizes = [32, 16], strides = [1, 1]} : vector<32x96xf32> to vector<32x16xf32>
    %137 = vector.extract_strided_slice %130 {offsets = [0, 64], sizes = [32, 16], strides = [1, 1]} : vector<32x96xf32> to vector<32x16xf32>
    %cst_74 = arith.constant dense<0.000000e+00> : vector<32x32xf32>
    %138 = tpu.matmul %135, %136, %cst_74 {dimension_numbers = #tpu.dot_dimension_numbers<[1], [1], [0], [0], [0, 0, 1, 0], [], []>} : vector<32x16xf32>, vector<32x16xf32>, vector<32x32xf32> -> vector<32x32xf32>
    %139 = arith.addf %138, %1 : vector<32x32xf32>
    %cst_75 = arith.constant dense<0xFF800000> : vector<32xf32>
    %140 = vector.multi_reduction <maximumf>, %139, %cst_75 [1] : vector<32x32xf32> to vector<32xf32>
    %141 = vector.shape_cast %140 : vector<32xf32> to vector<32x1xf32>
    %142 = vector.broadcast %141 : vector<32x1xf32> to vector<32x32xf32>
    %143 = arith.subf %139, %142 : vector<32x32xf32>
    %144 = math.exp %143 : vector<32x32xf32>
    %cst_76 = arith.constant dense<0.000000e+00> : vector<32xf32>
    %145 = vector.multi_reduction <add>, %144, %cst_76 [1] : vector<32x32xf32> to vector<32xf32>
    %146 = vector.shape_cast %145 : vector<32xf32> to vector<32x1xf32>
    %147 = vector.broadcast %146 : vector<32x1xf32> to vector<32x32xf32>
    %148 = arith.divf %144, %147 : vector<32x32xf32>
    %cst_77 = arith.constant dense<0.000000e+00> : vector<32x16xf32>
    %149 = tpu.matmul %148, %137, %cst_77 {dimension_numbers = #tpu.dot_dimension_numbers<[1], [0], [0], [1], [0, 0, 1, 1], [], []>} : vector<32x32xf32>, vector<32x16xf32>, vector<32x16xf32> -> vector<32x16xf32>
    %150 = vector.extract_strided_slice %132 {offsets = [0, 0], sizes = [16, 32], strides = [1, 1]} : vector<32x32xf32> to vector<16x32xf32>
    %cst_78 = arith.constant dense<0.000000e+00> : vector<32x32xf32>
    %151 = tpu.matmul %149, %150, %cst_78 {dimension_numbers = #tpu.dot_dimension_numbers<[1], [0], [0], [1], [0, 0, 1, 1], [], []>} : vector<32x16xf32>, vector<16x32xf32>, vector<32x32xf32> -> vector<32x32xf32>
    %152 = vector.extract_strided_slice %130 {offsets = [0, 16], sizes = [32, 16], strides = [1, 1]} : vector<32x96xf32> to vector<32x16xf32>
    %cst_79 = arith.constant 2.500000e-01 : f32
    %153 = vector.broadcast %cst_79 : f32 to vector<32x16xf32>
    %154 = arith.mulf %152, %153 : vector<32x16xf32>
    %155 = vector.extract_strided_slice %130 {offsets = [0, 48], sizes = [32, 16], strides = [1, 1]} : vector<32x96xf32> to vector<32x16xf32>
    %156 = vector.extract_strided_slice %130 {offsets = [0, 80], sizes = [32, 16], strides = [1, 1]} : vector<32x96xf32> to vector<32x16xf32>
    %cst_80 = arith.constant dense<0.000000e+00> : vector<32x32xf32>
    %157 = tpu.matmul %154, %155, %cst_80 {dimension_numbers = #tpu.dot_dimension_numbers<[1], [1], [0], [0], [0, 0, 1, 0], [], []>} : vector<32x16xf32>, vector<32x16xf32>, vector<32x32xf32> -> vector<32x32xf32>
    %158 = arith.addf %157, %1 : vector<32x32xf32>
    %cst_81 = arith.constant dense<0xFF800000> : vector<32xf32>
    %159 = vector.multi_reduction <maximumf>, %158, %cst_81 [1] : vector<32x32xf32> to vector<32xf32>
    %160 = vector.shape_cast %159 : vector<32xf32> to vector<32x1xf32>
    %161 = vector.broadcast %160 : vector<32x1xf32> to vector<32x32xf32>
    %162 = arith.subf %158, %161 : vector<32x32xf32>
    %163 = math.exp %162 : vector<32x32xf32>
    %cst_82 = arith.constant dense<0.000000e+00> : vector<32xf32>
    %164 = vector.multi_reduction <add>, %163, %cst_82 [1] : vector<32x32xf32> to vector<32xf32>
    %165 = vector.shape_cast %164 : vector<32xf32> to vector<32x1xf32>
    %166 = vector.broadcast %165 : vector<32x1xf32> to vector<32x32xf32>
    %167 = arith.divf %163, %166 : vector<32x32xf32>
    %cst_83 = arith.constant dense<0.000000e+00> : vector<32x16xf32>
    %168 = tpu.matmul %167, %156, %cst_83 {dimension_numbers = #tpu.dot_dimension_numbers<[1], [0], [0], [1], [0, 0, 1, 1], [], []>} : vector<32x32xf32>, vector<32x16xf32>, vector<32x16xf32> -> vector<32x16xf32>
    %169 = vector.extract_strided_slice %132 {offsets = [16, 0], sizes = [16, 32], strides = [1, 1]} : vector<32x32xf32> to vector<16x32xf32>
    %cst_84 = arith.constant dense<0.000000e+00> : vector<32x32xf32>
    %170 = tpu.matmul %168, %169, %cst_84 {dimension_numbers = #tpu.dot_dimension_numbers<[1], [0], [0], [1], [0, 0, 1, 1], [], []>} : vector<32x16xf32>, vector<16x32xf32>, vector<32x32xf32> -> vector<32x32xf32>
    %171 = arith.addf %151, %170 : vector<32x32xf32>
    %c1_85 = arith.constant 1 : index
    %c0_86 = arith.constant 0 : index
    %c0_87 = arith.constant 0 : index
    %172 = vector.load %arg5[%c1_85, %c0_86, %c0_87] : memref<2x1x32xf32, #tpu.memory_space<vmem>>, vector<1x1x32xf32>
    %173 = vector.shape_cast %172 : vector<1x1x32xf32> to vector<1x32xf32>
    %174 = vector.broadcast %173 : vector<1x32xf32> to vector<32x32xf32>
    %175 = arith.addf %171, %174 : vector<32x32xf32>
    %176 = arith.addf %123, %175 : vector<32x32xf32>
    %c1_88 = arith.constant 1 : index
    %c0_89 = arith.constant 0 : index
    %c0_90 = arith.constant 0 : index
    %177 = vector.load %arg6[%c1_88, %c0_89, %c0_90] : memref<2x1x32xf32, #tpu.memory_space<vmem>>, vector<1x1x32xf32>
    %178 = vector.shape_cast %177 : vector<1x1x32xf32> to vector<1x32xf32>
    %c1_91 = arith.constant 1 : index
    %c0_92 = arith.constant 0 : index
    %c0_93 = arith.constant 0 : index
    %179 = vector.load %arg7[%c1_91, %c0_92, %c0_93] : memref<2x1x32xf32, #tpu.memory_space<vmem>>, vector<1x1x32xf32>
    %180 = vector.shape_cast %179 : vector<1x1x32xf32> to vector<1x32xf32>
    %cst_94 = arith.constant dense<0.000000e+00> : vector<32xf32>
    %181 = vector.multi_reduction <add>, %176, %cst_94 [1] : vector<32x32xf32> to vector<32xf32>
    %182 = vector.shape_cast %181 : vector<32xf32> to vector<32x1xf32>
    %cst_95 = arith.constant 3.200000e+01 : f32
    %183 = vector.broadcast %cst_95 : f32 to vector<32x1xf32>
    %184 = arith.divf %182, %183 : vector<32x1xf32>
    %185 = vector.broadcast %184 : vector<32x1xf32> to vector<32x32xf32>
    %186 = arith.subf %176, %185 : vector<32x32xf32>
    %187 = arith.mulf %186, %186 : vector<32x32xf32>
    %cst_96 = arith.constant dense<0.000000e+00> : vector<32xf32>
    %188 = vector.multi_reduction <add>, %187, %cst_96 [1] : vector<32x32xf32> to vector<32xf32>
    %189 = vector.shape_cast %188 : vector<32xf32> to vector<32x1xf32>
    %cst_97 = arith.constant 3.200000e+01 : f32
    %190 = vector.broadcast %cst_97 : f32 to vector<32x1xf32>
    %191 = arith.divf %189, %190 : vector<32x1xf32>
    %192 = vector.broadcast %184 : vector<32x1xf32> to vector<32x32xf32>
    %193 = arith.subf %176, %192 : vector<32x32xf32>
    %cst_98 = arith.constant 9.99999974E-6 : f32
    %194 = vector.broadcast %cst_98 : f32 to vector<32x1xf32>
    %195 = arith.addf %191, %194 : vector<32x1xf32>
    %196 = math.rsqrt %195 : vector<32x1xf32>
    %197 = vector.broadcast %196 : vector<32x1xf32> to vector<32x32xf32>
    %198 = arith.mulf %193, %197 : vector<32x32xf32>
    %199 = vector.broadcast %178 : vector<1x32xf32> to vector<32x32xf32>
    %200 = arith.mulf %198, %199 : vector<32x32xf32>
    %201 = vector.broadcast %180 : vector<1x32xf32> to vector<32x32xf32>
    %202 = arith.addf %200, %201 : vector<32x32xf32>
    %c1_99 = arith.constant 1 : index
    %c0_100 = arith.constant 0 : index
    %c0_101 = arith.constant 0 : index
    %203 = vector.load %arg8[%c1_99, %c0_100, %c0_101] : memref<2x32x128xf32, #tpu.memory_space<vmem>>, vector<1x32x128xf32>
    %204 = vector.shape_cast %203 : vector<1x32x128xf32> to vector<32x128xf32>
    %cst_102 = arith.constant dense<0.000000e+00> : vector<32x128xf32>
    %205 = tpu.matmul %202, %204, %cst_102 {dimension_numbers = #tpu.dot_dimension_numbers<[1], [0], [0], [1], [0, 0, 1, 1], [], []>} : vector<32x32xf32>, vector<32x128xf32>, vector<32x128xf32> -> vector<32x128xf32>
    %c1_103 = arith.constant 1 : index
    %c0_104 = arith.constant 0 : index
    %c0_105 = arith.constant 0 : index
    %206 = vector.load %arg9[%c1_103, %c0_104, %c0_105] : memref<2x1x128xf32, #tpu.memory_space<vmem>>, vector<1x1x128xf32>
    %207 = vector.shape_cast %206 : vector<1x1x128xf32> to vector<1x128xf32>
    %208 = vector.broadcast %207 : vector<1x128xf32> to vector<32x128xf32>
    %209 = arith.addf %205, %208 : vector<32x128xf32>
    %cst_106 = arith.constant 0.000000e+00 : f32
    %210 = vector.broadcast %cst_106 : f32 to vector<32x128xf32>
    %211 = arith.maximumf %209, %210 : vector<32x128xf32>
    %c1_107 = arith.constant 1 : index
    %c0_108 = arith.constant 0 : index
    %c0_109 = arith.constant 0 : index
    %212 = vector.load %arg10[%c1_107, %c0_108, %c0_109] : memref<2x128x32xf32, #tpu.memory_space<vmem>>, vector<1x128x32xf32>
    %213 = vector.shape_cast %212 : vector<1x128x32xf32> to vector<128x32xf32>
    %cst_110 = arith.constant dense<0.000000e+00> : vector<32x32xf32>
    %214 = tpu.matmul %211, %213, %cst_110 {dimension_numbers = #tpu.dot_dimension_numbers<[1], [0], [0], [1], [0, 0, 1, 1], [], []>} : vector<32x128xf32>, vector<128x32xf32>, vector<32x32xf32> -> vector<32x32xf32>
    %c1_111 = arith.constant 1 : index
    %c0_112 = arith.constant 0 : index
    %c0_113 = arith.constant 0 : index
    %215 = vector.load %arg11[%c1_111, %c0_112, %c0_113] : memref<2x1x32xf32, #tpu.memory_space<vmem>>, vector<1x1x32xf32>
    %216 = vector.shape_cast %215 : vector<1x1x32xf32> to vector<1x32xf32>
    %217 = vector.broadcast %216 : vector<1x32xf32> to vector<32x32xf32>
    %218 = arith.addf %214, %217 : vector<32x32xf32>
    %219 = arith.addf %202, %218 : vector<32x32xf32>
    %c1_114 = arith.constant 1 : index
    %c0_115 = arith.constant 0 : index
    %c0_116 = arith.constant 0 : index
    %220 = vector.load %arg12[%c1_114, %c0_115, %c0_116] : memref<2x1x32xf32, #tpu.memory_space<vmem>>, vector<1x1x32xf32>
    %221 = vector.shape_cast %220 : vector<1x1x32xf32> to vector<1x32xf32>
    %c1_117 = arith.constant 1 : index
    %c0_118 = arith.constant 0 : index
    %c0_119 = arith.constant 0 : index
    %222 = vector.load %arg13[%c1_117, %c0_118, %c0_119] : memref<2x1x32xf32, #tpu.memory_space<vmem>>, vector<1x1x32xf32>
    %223 = vector.shape_cast %222 : vector<1x1x32xf32> to vector<1x32xf32>
    %cst_120 = arith.constant dense<0.000000e+00> : vector<32xf32>
    %224 = vector.multi_reduction <add>, %219, %cst_120 [1] : vector<32x32xf32> to vector<32xf32>
    %225 = vector.shape_cast %224 : vector<32xf32> to vector<32x1xf32>
    %cst_121 = arith.constant 3.200000e+01 : f32
    %226 = vector.broadcast %cst_121 : f32 to vector<32x1xf32>
    %227 = arith.divf %225, %226 : vector<32x1xf32>
    %228 = vector.broadcast %227 : vector<32x1xf32> to vector<32x32xf32>
    %229 = arith.subf %219, %228 : vector<32x32xf32>
    %230 = arith.mulf %229, %229 : vector<32x32xf32>
    %cst_122 = arith.constant dense<0.000000e+00> : vector<32xf32>
    %231 = vector.multi_reduction <add>, %230, %cst_122 [1] : vector<32x32xf32> to vector<32xf32>
    %232 = vector.shape_cast %231 : vector<32xf32> to vector<32x1xf32>
    %cst_123 = arith.constant 3.200000e+01 : f32
    %233 = vector.broadcast %cst_123 : f32 to vector<32x1xf32>
    %234 = arith.divf %232, %233 : vector<32x1xf32>
    %235 = vector.broadcast %227 : vector<32x1xf32> to vector<32x32xf32>
    %236 = arith.subf %219, %235 : vector<32x32xf32>
    %cst_124 = arith.constant 9.99999974E-6 : f32
    %237 = vector.broadcast %cst_124 : f32 to vector<32x1xf32>
    %238 = arith.addf %234, %237 : vector<32x1xf32>
    %239 = math.rsqrt %238 : vector<32x1xf32>
    %240 = vector.broadcast %239 : vector<32x1xf32> to vector<32x32xf32>
    %241 = arith.mulf %236, %240 : vector<32x32xf32>
    %242 = vector.broadcast %221 : vector<1x32xf32> to vector<32x32xf32>
    %243 = arith.mulf %241, %242 : vector<32x32xf32>
    %244 = vector.broadcast %223 : vector<1x32xf32> to vector<32x32xf32>
    %245 = arith.addf %243, %244 : vector<32x32xf32>
    %c0_125 = arith.constant 0 : index
    %c0_126 = arith.constant 0 : index
    %246 = vector.load %arg14[%c0_125, %c0_126] : memref<32x256xf32, #tpu.memory_space<vmem>>, vector<32x256xf32>
    %cst_127 = arith.constant dense<0.000000e+00> : vector<32x256xf32>
    %247 = tpu.matmul %245, %246, %cst_127 {dimension_numbers = #tpu.dot_dimension_numbers<[1], [0], [0], [1], [0, 0, 1, 1], [], []>} : vector<32x32xf32>, vector<32x256xf32>, vector<32x256xf32> -> vector<32x256xf32>
    %c0_128 = arith.constant 0 : index
    %c0_129 = arith.constant 0 : index
    %248 = vector.load %arg15[%c0_128, %c0_129] : memref<1x256xf32, #tpu.memory_space<vmem>>, vector<1x256xf32>
    %249 = vector.broadcast %248 : vector<1x256xf32> to vector<32x256xf32>
    %250 = arith.addf %247, %249 : vector<32x256xf32>
    %c0_130 = arith.constant 0 : index
    %c0_131 = arith.constant 0 : index
    %251 = vector.load %arg16[%c0_130, %c0_131] : memref<32x256xf32, #tpu.memory_space<vmem>>, vector<32x256xf32>
    tpu.vector_store %arg16[%c0_130, %c0_131], %250 {strides = array<i32>} : memref<32x256xf32, #tpu.memory_space<vmem>>, vector<32x256xf32>,
    return
  }
}

</mosaic_0001>

<llo_original>
// kernel: transformer_forward.1
$region0: #{transformer_forward.1}
  #allocation0 [shape = 'u32[]', space=smem, size = 0x4, offset = 0x4, fixed_abs, tag = 'smem constant byte address 0x4 - core index']
  #allocation1 [shape = 'u32[144,128]{1,0:T(1,128)}', space=vmem, size = 0x12000, scoped, tag = 'internal scratch']
  %s0 = inlined_call_operand.vmem [shape: f32[32,32], index: 0, kind: input, shape index: {}]
  %s1 = inlined_call_operand.vmem [shape: f32[32,32], index: 1, kind: input, shape index: {}]
  %s2 = inlined_call_operand.vmem [shape: f32[2,32,96], index: 2, kind: input, shape index: {}]
  %s3 = inlined_call_operand.vmem [shape: f32[2,1,96], index: 3, kind: input, shape index: {}]
  %s4 = inlined_call_operand.vmem [shape: f32[2,32,32], index: 4, kind: input, shape index: {}]
  %s5 = inlined_call_operand.vmem [shape: f32[2,1,32], index: 5, kind: input, shape index: {}]
  %s6 = inlined_call_operand.vmem [shape: f32[2,1,32], index: 6, kind: input, shape index: {}]
  %s7 = inlined_call_operand.vmem [shape: f32[2,1,32], index: 7, kind: input, shape index: {}]
  %s8 = inlined_call_operand.vmem [shape: f32[2,32,128], index: 8, kind: input, shape index: {}]
  %s9 = inlined_call_operand.vmem [shape: f32[2,1,128], index: 9, kind: input, shape index: {}]
  %s10 = inlined_call_operand.vmem [shape: f32[2,128,32], index: 10, kind: input, shape index: {}]
  %s11 = inlined_call_operand.vmem [shape: f32[2,1,32], index: 11, kind: input, shape index: {}]
  %s12 = inlined_call_operand.vmem [shape: f32[2,1,32], index: 12, kind: input, shape index: {}]
  %s13 = inlined_call_operand.vmem [shape: f32[2,1,32], index: 13, kind: input, shape index: {}]
  %s14 = inlined_call_operand.vmem [shape: f32[32,256], index: 14, kind: input, shape index: {}]
  %s15 = inlined_call_operand.vmem [shape: f32[1,256], index: 15, kind: input, shape index: {}]
  %s16 = inlined_call_operand.vmem [shape: f32[32,256], index: 16, kind: output, shape index: {}]
  %s17 = sld [smem:[#allocation0]]
  $region74: #{transformer_forward.1} parent=0
    _
  %s19 = ssub.s32 1, %s17
  %s20 = scalar_select 0, %s19, %s17
  // Predicated region
  $region2: #{transformer_forward.1} parent=0 // pred_check
    _
  $region3: #{transformer_forward.1} parent=0 // pred_check_branch
    %22 = sbr.rel (0) target = $region5
  $region4: #{transformer_forward.1} parent=0 // pred_region
    _
  $region5: #{transformer_forward.1} parent=0 // pred_fallthru
    _
  // Predicated region
  $region6: #{transformer_forward.1} parent=0 // pred_check
    _
  $region7: #{transformer_forward.1} parent=0 // pred_check_branch
    %24 = sbr.rel (0) target = $region9
  $region8: #{transformer_forward.1} parent=0 // pred_region
    _
  $region9: #{transformer_forward.1} parent=0 // pred_fallthru
    _
  // Predicated region
  $region10: #{transformer_forward.1} parent=0 // pred_check
    _
  $region11: #{transformer_forward.1} parent=0 // pred_check_branch
    %26 = sbr.rel (0) target = $region13
  $region12: #{transformer_forward.1} parent=0 // pred_region
    _
  $region13: #{transformer_forward.1} parent=0 // pred_fallthru
    _
  // Predicated region
  $region14: #{transformer_forward.1} parent=0 // pred_check
    _
  $region15: #{transformer_forward.1} parent=0 // pred_check_branch
    %28 = sbr.rel (0) target = $region17
  $region16: #{transformer_forward.1} parent=0 // pred_region
    _
  $region17: #{transformer_forward.1} parent=0 // pred_fallthru
    _
  // Predicated region
  $region18: #{transformer_forward.1} parent=0 // pred_check
    _
  $region19: #{transformer_forward.1} parent=0 // pred_check_branch
    %30 = sbr.rel (0) target = $region21
  $region20: #{transformer_forward.1} parent=0 // pred_region
    _
  $region21: #{transformer_forward.1} parent=0 // pred_fallthru
    _
  // Predicated region
  $region22: #{transformer_forward.1} parent=0 // pred_check
    _
  $region23: #{transformer_forward.1} parent=0 // pred_check_branch
    %32 = sbr.rel (0) target = $region25
  $region24: #{transformer_forward.1} parent=0 // pred_region
    _
  $region25: #{transformer_forward.1} parent=0 // pred_fallthru
    _
  // Predicated region
  $region26: #{transformer_forward.1} parent=0 // pred_check
    _
  $region27: #{transformer_forward.1} parent=0 // pred_check_branch
    %34 = sbr.rel (0) target = $region29
  $region28: #{transformer_forward.1} parent=0 // pred_region
    _
  $region29: #{transformer_forward.1} parent=0 // pred_fallthru
    _
  // Predicated region
  $region30: #{transformer_forward.1} parent=0 // pred_check
    _
  $region31: #{transformer_forward.1} parent=0 // pred_check_branch
    %36 = sbr.rel (0) target = $region33
  $region32: #{transformer_forward.1} parent=0 // pred_region
    _
  $region33: #{transformer_forward.1} parent=0 // pred_fallthru
    _
  // Predicated region
  $region34: #{transformer_forward.1} parent=0 // pred_check
    _
  $region35: #{transformer_forward.1} parent=0 // pred_check_branch
    %38 = sbr.rel (0) target = $region37
  $region36: #{transformer_forward.1} parent=0 // pred_region
    _
  $region37: #{transformer_forward.1} parent=0 // pred_fallthru
    _
  // Predicated region
  $region38: #{transformer_forward.1} parent=0 // pred_check
    _
  $region39: #{transformer_forward.1} parent=0 // pred_check_branch
    %40 = sbr.rel (0) target = $region41
  $region40: #{transformer_forward.1} parent=0 // pred_region
    _
  $region41: #{transformer_forward.1} parent=0 // pred_fallthru
    _
  // Predicated region
  $region42: #{transformer_forward.1} parent=0 // pred_check
    _
  $region43: #{transformer_forward.1} parent=0 // pred_check_branch
    %42 = sbr.rel (0) target = $region45
  $region44: #{transformer_forward.1} parent=0 // pred_region
    _
  $region45: #{transformer_forward.1} parent=0 // pred_fallthru
    _
  // Predicated region
  $region46: #{transformer_forward.1} parent=0 // pred_check
    _
  $region47: #{transformer_forward.1} parent=0 // pred_check_branch
    %44 = sbr.rel (0) target = $region49
  $region48: #{transformer_forward.1} parent=0 // pred_region
    _
  $region49: #{transformer_forward.1} parent=0 // pred_fallthru
    _
  // Predicated region
  $region50: #{transformer_forward.1} parent=0 // pred_check
    _
  $region51: #{transformer_forward.1} parent=0 // pred_check_branch
    %46 = sbr.rel (0) target = $region53
  $region52: #{transformer_forward.1} parent=0 // pred_region
    _
  $region53: #{transformer_forward.1} parent=0 // pred_fallthru
    _
  // Predicated region
  $region54: #{transformer_forward.1} parent=0 // pred_check
    _
  $region55: #{transformer_forward.1} parent=0 // pred_check_branch
    %48 = sbr.rel (0) target = $region57
  $region56: #{transformer_forward.1} parent=0 // pred_region
    _
  $region57: #{transformer_forward.1} parent=0 // pred_fallthru
    _
  // Predicated region
  $region58: #{transformer_forward.1} parent=0 // pred_check
    _
  $region59: #{transformer_forward.1} parent=0 // pred_check_branch
    %50 = sbr.rel (0) target = $region61
  $region60: #{transformer_forward.1} parent=0 // pred_region
    _
  $region61: #{transformer_forward.1} parent=0 // pred_fallthru
    _
  // Predicated region
  $region62: #{transformer_forward.1} parent=0 // pred_check
    _
  $region63: #{transformer_forward.1} parent=0 // pred_check_branch
    %52 = sbr.rel (0) target = $region65
  $region64: #{transformer_forward.1} parent=0 // pred_region
    _
  $region65: #{transformer_forward.1} parent=0 // pred_fallthru
    _
  %v53 = vld [vmem:[%s0] sm:$0xff]
  %v54 = vld [vmem:[%s0 + $0x8] sm:$0xff]
  %v55 = vld [vmem:[%s0 + $0x10] sm:$0xff]
  %v56 = vld [vmem:[%s0 + $0x18] sm:$0xff]
  %v57 = vld [vmem:[%s1] sm:$0xff]
  %v58 = vld [vmem:[%s1 + $0x8] sm:$0xff]
  %v59 = vld [vmem:[%s1 + $0x10] sm:$0xff]
  %v60 = vld [vmem:[%s1 + $0x18] sm:$0xff]
  %v61 = vld [vmem:[%s2] sm:$0xff]
  %v62 = vld [vmem:[%s2 + $0x8] sm:$0xff]
  %v63 = vld [vmem:[%s2 + $0x10] sm:$0xff]
  %v64 = vld [vmem:[%s2 + $0x18] sm:$0xff]
  %v65 = vld [vmem:[%s3] sm:$0x1]
  %v67 = vlaneseq
  %v68 = vshrl.u32 %v67, 7
  %v69 = vsub.s32 0, %v68
  %v70 = vrot.slane %v65, %v69
  %vm72 = vcmask 261120
  %v74 = vsel %vm72, %v53, 0
  %v77 = vsel %vm72, %v54, 0
  %v80 = vsel %vm72, %v55, 0
  %v83 = vsel %vm72, %v56, 0
  %85 = vmatprep.subr.mxu0 0.0
  %86 = vmatpush1.msra.mxu0 0.0
  %87 = vmatprep.subr.mxu0 0.0
  %88 = vmatpush1.msra.mxu0 0.0
  %89 = vmatprep.subr.mxu0 0.0
  %90 = vmatpush1.msra.mxu0 0.0
  %91 = vmatprep.subr.mxu0 0.0
  %92 = vmatpush1.msra.mxu0 0.0
  %93 = vmatprep.subr.mxu0 0.0
  %94 = vmatpush1.msra.mxu0 0.0
  %95 = vmatprep.subr.mxu0 0.0
  %96 = vmatpush1.msra.mxu0 0.0
  %97 = vmatprep.subr.mxu0 0.0
  %98 = vmatpush1.msra.mxu0 0.0
  %99 = vmatprep.subr.mxu0 0.0
  %100 = vmatpush1.msra.mxu0 0.0
  %101 = vmatprep.subr.mxu0 0.0
  %102 = vmatpush1.msra.mxu0 0.0
  %103 = vmatprep.subr.mxu0 0.0
  %104 = vmatpush1.msra.mxu0 0.0
  %105 = vmatprep.subr.mxu0 0.0
  %106 = vmatpush1.msra.mxu0 0.0
  %107 = vmatprep.subr.mxu0 0.0
  %108 = vmatpush1.msra.mxu0 0.0
  %109 = vmatprep.subr.mxu0 0.0
  %110 = vmatpush1.msra.mxu0 %v64
  %111 = vmatprep.subr.mxu0 0.0
  %112 = vmatpush1.msra.mxu0 %v63
  %113 = vmatprep.subr.mxu0 0.0
  %114 = vmatpush1.msra.mxu0 %v62
  %115 = vmatprep.subr.mxu0 0.0
  %116 = vmatpush1.msra.mxu0 %v61
  %117 = vmatprep.subr.mxu0 0.0
  %118 = vmatpush2.msra.mxu0 0.0
  %119 = vmatprep.subr.mxu0 0.0
  %120 = vmatpush2.msra.mxu0 0.0
  %121 = vmatprep.subr.mxu0 0.0
  %122 = vmatpush2.msra.mxu0 0.0
  %123 = vmatprep.subr.mxu0 0.0
  %124 = vmatpush2.msra.mxu0 0.0
  %125 = vmatprep.subr.mxu0 0.0
  %126 = vmatpush2.msra.mxu0 0.0
  %127 = vmatprep.subr.mxu0 0.0
  %128 = vmatpush2.msra.mxu0 0.0
  %129 = vmatprep.subr.mxu0 0.0
  %130 = vmatpush2.msra.mxu0 0.0
  %131 = vmatprep.subr.mxu0 0.0
  %132 = vmatpush2.msra.mxu0 0.0
  %133 = vmatprep.subr.mxu0 0.0
  %134 = vmatpush2.msra.mxu0 0.0
  %135 = vmatprep.subr.mxu0 0.0
  %136 = vmatpush2.msra.mxu0 0.0
  %137 = vmatprep.subr.mxu0 0.0
  %138 = vmatpush2.msra.mxu0 0.0
  %139 = vmatprep.subr.mxu0 0.0
  %140 = vmatpush2.msra.mxu0 0.0
  %141 = vmatprep.subr.mxu0 0.0
  %142 = vmatpush2.msra.mxu0 0.0
  %143 = vmatprep.subr.mxu0 0.0
  %144 = vmatpush2.msra.mxu0 0.0
  %145 = vmatprep.subr.mxu0 0.0
  %146 = vmatpush2.msra.mxu0 0.0
  %147 = vmatprep.subr.mxu0 0.0
  %148 = vmatpush2.msra.mxu0 0.0
  %149 = vmatprep.mubr.f32.mxu0 0.0
  %150 = vmatmul.mubr.f32.gmra.mxu0 %v74
  %v151 = vpop.f32.mrf.mxu0
  %v152 = vadd.f32 %v70, %v151
  %v153 = vpop.f32.mrf.mxu0
  %154 = vmatprep.mubr.f32.mxu0 0.0
  %155 = vmatmul.mubr.f32.gmra.mxu0 %v77
  %v156 = vpop.f32.mrf.mxu0
  %v157 = vadd.f32 %v70, %v156
  %v158 = vpop.f32.mrf.mxu0
  %159 = vmatprep.mubr.f32.mxu0 0.0
  %160 = vmatmul.mubr.f32.gmra.mxu0 %v80
  %v161 = vpop.f32.mrf.mxu0
  %v162 = vadd.f32 %v70, %v161
  %v163 = vpop.f32.mrf.mxu0
  %164 = vmatprep.mubr.f32.mxu0 0.0
  %165 = vmatmul.mubr.f32.gmra.mxu0 %v83
  %v166 = vpop.f32.mrf.mxu0
  %v167 = vadd.f32 %v70, %v166
  %v168 = vpop.f32.mrf.mxu0
  %169 = vdwg.mxu0
  %v170 = vld [vmem:[%s4] sm:$0xff]
  %v171 = vld [vmem:[%s4 + $0x8] sm:$0xff]
  %v172 = vld [vmem:[%s4 + $0x10] sm:$0xff]
  %v173 = vld [vmem:[%s4 + $0x18] sm:$0xff]
  %v174 = vmul.f32 %v152, 0.25
  %v175 = vmul.f32 %v157, 0.25
  %v176 = vmul.f32 %v162, 0.25
  %v177 = vmul.f32 %v167, 0.25
  %182 = vrot.lane.b32.xlu0 %v152, 96
  %v183 = vpop.permute.xlu0 %182
  %184 = vrot.lane.b32.xlu0 %v157, 96
  %v185 = vpop.permute.xlu0 %184
  %186 = vrot.lane.b32.xlu0 %v162, 96
  %v187 = vpop.permute.xlu0 %186
  %188 = vrot.lane.b32.xlu0 %v167, 96
  %v189 = vpop.permute.xlu0 %188
  %vm190 = vcmask 130048
  %v192 = vsel %vm190, %v174, 0
  %v195 = vsel %vm190, %v175, 0
  %v198 = vsel %vm190, %v176, 0
  %v201 = vsel %vm190, %v177, 0
  %v203 = vsel %vm190, %v183, 0
  %v205 = vsel %vm190, %v185, 0
  %v207 = vsel %vm190, %v187, 0
  %v209 = vsel %vm190, %v189, 0
  %211 = vmatprep.subr.mxu0 0.0
  %212 = vmatpush1.xpose.msra.mxu0 0.0
  %213 = vmatprep.subr.mxu0 0.0
  %214 = vmatpush1.xpose.msra.mxu0 0.0
  %215 = vmatprep.subr.mxu0 0.0
  %216 = vmatpush1.xpose.msra.mxu0 0.0
  %217 = vmatprep.subr.mxu0 0.0
  %218 = vmatpush1.xpose.msra.mxu0 0.0
  %219 = vmatprep.subr.mxu0 0.0
  %220 = vmatpush1.xpose.msra.mxu0 0.0
  %221 = vmatprep.subr.mxu0 0.0
  %222 = vmatpush1.xpose.msra.mxu0 0.0
  %223 = vmatprep.subr.mxu0 0.0
  %224 = vmatpush1.xpose.msra.mxu0 0.0
  %225 = vmatprep.subr.mxu0 0.0
  %226 = vmatpush1.xpose.msra.mxu0 0.0
  %227 = vmatprep.subr.mxu0 0.0
  %228 = vmatpush1.xpose.msra.mxu0 0.0
  %229 = vmatprep.subr.mxu0 0.0
  %230 = vmatpush1.xpose.msra.mxu0 0.0
  %231 = vmatprep.subr.mxu0 0.0
  %232 = vmatpush1.xpose.msra.mxu0 0.0
  %233 = vmatprep.subr.mxu0 0.0
  %234 = vmatpush1.xpose.msra.mxu0 0.0
  %235 = vmatprep.subr.mxu0 0.0
  %236 = vmatpush1.xpose.msra.mxu0 %v209
  %237 = vmatprep.subr.mxu0 0.0
  %238 = vmatpush1.xpose.msra.mxu0 %v207
  %239 = vmatprep.subr.mxu0 0.0
  %240 = vmatpush1.xpose.msra.mxu0 %v205
  %241 = vmatprep.subr.mxu0 0.0
  %242 = vmatpush1.xpose.msra.mxu0 %v203
  %243 = vmatprep.subr.mxu0 0.0
  %244 = vmatpush2.xpose.msra.mxu0 0.0
  %245 = vmatprep.subr.mxu0 0.0
  %246 = vmatpush2.xpose.msra.mxu0 0.0
  %247 = vmatprep.subr.mxu0 0.0
  %248 = vmatpush2.xpose.msra.mxu0 0.0
  %249 = vmatprep.subr.mxu0 0.0
  %250 = vmatpush2.xpose.msra.mxu0 0.0
  %251 = vmatprep.subr.mxu0 0.0
  %252 = vmatpush2.xpose.msra.mxu0 0.0
  %253 = vmatprep.subr.mxu0 0.0
  %254 = vmatpush2.xpose.msra.mxu0 0.0
  %255 = vmatprep.subr.mxu0 0.0
  %256 = vmatpush2.xpose.msra.mxu0 0.0
  %257 = vmatprep.subr.mxu0 0.0
  %258 = vmatpush2.xpose.msra.mxu0 0.0
  %259 = vmatprep.subr.mxu0 0.0
  %260 = vmatpush2.xpose.msra.mxu0 0.0
  %261 = vmatprep.subr.mxu0 0.0
  %262 = vmatpush2.xpose.msra.mxu0 0.0
  %263 = vmatprep.subr.mxu0 0.0
  %264 = vmatpush2.xpose.msra.mxu0 0.0
  %265 = vmatprep.subr.mxu0 0.0
  %266 = vmatpush2.xpose.msra.mxu0 0.0
  %267 = vmatprep.subr.mxu0 0.0
  %268 = vmatpush2.xpose.msra.mxu0 0.0
  %269 = vmatprep.subr.mxu0 0.0
  %270 = vmatpush2.xpose.msra.mxu0 0.0
  %271 = vmatprep.subr.mxu0 0.0
  %272 = vmatpush2.xpose.msra.mxu0 0.0
  %273 = vmatprep.subr.mxu0 0.0
  %274 = vmatpush2.xpose.msra.mxu0 0.0
  %275 = vmatprep.mubr.f32.mxu0 0.0
  %276 = vmatmul.mubr.f32.gmra.mxu0 %v192
  %v277 = vpop.f32.mrf.mxu0
  %v278 = vadd.f32 %v57, %v277
  %v279 = vpop.f32.mrf.mxu0
  %280 = vmatprep.mubr.f32.mxu0 0.0
  %281 = vmatmul.mubr.f32.gmra.mxu0 %v195
  %v282 = vpop.f32.mrf.mxu0
  %v283 = vadd.f32 %v58, %v282
  %v284 = vpop.f32.mrf.mxu0
  %285 = vmatprep.mubr.f32.mxu0 0.0
  %286 = vmatmul.mubr.f32.gmra.mxu0 %v198
  %v287 = vpop.f32.mrf.mxu0
  %v288 = vadd.f32 %v59, %v287
  %v289 = vpop.f32.mrf.mxu0
  %290 = vmatprep.mubr.f32.mxu0 0.0
  %291 = vmatmul.mubr.f32.gmra.mxu0 %v201
  %v292 = vpop.f32.mrf.mxu0
  %v293 = vadd.f32 %v60, %v292
  %v294 = vpop.f32.mrf.mxu0
  %295 = vdwg.mxu0
  %v296 = vsel %vm72, %v278, -inf
  %297 = vmax.xlane.f32.xlu0 %v296
  %v298 = vpop.xlane.xlu0 %297
  %v299 = vsel %vm72, %v283, -inf
  %300 = vmax.xlane.f32.xlu0 %v299
  %v301 = vpop.xlane.xlu0 %300
  %v302 = vsel %vm72, %v288, -inf
  %303 = vmax.xlane.f32.xlu0 %v302
  %v304 = vpop.xlane.xlu0 %303
  %v305 = vsel %vm72, %v293, -inf
  %306 = vmax.xlane.f32.xlu0 %v305
  %v307 = vpop.xlane.xlu0 %306
  %v308 = vsub.f32 %v278, %v298
  %v309 = vsub.f32 %v283, %v301
  %v310 = vsub.f32 %v288, %v304
  %v311 = vsub.f32 %v293, %v307
  %v312 = vmul.f32 %v308, 1.442695
  %v313 = vpow.pop %v312
  %v314 = vmul.f32 %v309, 1.442695
  %v315 = vpow.pop %v314
  %v316 = vmul.f32 %v310, 1.442695
  %v317 = vpow.pop %v316
  %v318 = vmul.f32 %v311, 1.442695
  %v319 = vpow.pop %v318
  %v320 = vsel %vm72, %v313, 0.0
  %321 = vadd.xlane.f32.xlu0 %v320
  %v322 = vpop.xlane.xlu0 %321
  %v323 = vsel %vm72, %v315, 0.0
  %324 = vadd.xlane.f32.xlu0 %v323
  %v325 = vpop.xlane.xlu0 %324
  %v326 = vsel %vm72, %v317, 0.0
  %327 = vadd.xlane.f32.xlu0 %v326
  %v328 = vpop.xlane.xlu0 %327
  %v329 = vsel %vm72, %v319, 0.0
  %330 = vadd.xlane.f32.xlu0 %v329
  %v331 = vpop.xlane.xlu0 %330
  %v332 = vrcp.pop %v322
  %v333 = vmul.f32 %v313, %v332
  %v334 = vrcp.pop %v325
  %v335 = vmul.f32 %v315, %v334
  %v336 = vrcp.pop %v328
  %v337 = vmul.f32 %v317, %v336
  %v338 = vrcp.pop %v331
  %v339 = vmul.f32 %v319, %v338
  %340 = vrot.lane.b32.xlu0 %v152, 64
  %v341 = vpop.permute.xlu0 %340
  %342 = vrot.lane.b32.xlu0 %v157, 64
  %v343 = vpop.permute.xlu0 %342
  %344 = vrot.lane.b32.xlu0 %v162, 64
  %v345 = vpop.permute.xlu0 %344
  %346 = vrot.lane.b32.xlu0 %v167, 64
  %v347 = vpop.permute.xlu0 %346
  %v353 = vsel %vm72, %v333, 0
  %v356 = vsel %vm72, %v335, 0
  %v359 = vsel %vm72, %v337, 0
  %v362 = vsel %vm72, %v339, 0
  %364 = vmatprep.subr.mxu0 0.0
  %365 = vmatpush1.msra.mxu0 0.0
  %366 = vmatprep.subr.mxu0 0.0
  %367 = vmatpush1.msra.mxu0 0.0
  %368 = vmatprep.subr.mxu0 0.0
  %369 = vmatpush1.msra.mxu0 0.0
  %370 = vmatprep.subr.mxu0 0.0
  %371 = vmatpush1.msra.mxu0 0.0
  %372 = vmatprep.subr.mxu0 0.0
  %373 = vmatpush1.msra.mxu0 0.0
  %374 = vmatprep.subr.mxu0 0.0
  %375 = vmatpush1.msra.mxu0 0.0
  %376 = vmatprep.subr.mxu0 0.0
  %377 = vmatpush1.msra.mxu0 0.0
  %378 = vmatprep.subr.mxu0 0.0
  %379 = vmatpush1.msra.mxu0 0.0
  %380 = vmatprep.subr.mxu0 0.0
  %381 = vmatpush1.msra.mxu0 0.0
  %382 = vmatprep.subr.mxu0 0.0
  %383 = vmatpush1.msra.mxu0 0.0
  %384 = vmatprep.subr.mxu0 0.0
  %385 = vmatpush1.msra.mxu0 0.0
  %386 = vmatprep.subr.mxu0 0.0
  %387 = vmatpush1.msra.mxu0 0.0
  %388 = vmatprep.subr.mxu0 0.0
  %389 = vmatpush1.msra.mxu0 %v347
  %390 = vmatprep.subr.mxu0 0.0
  %391 = vmatpush1.msra.mxu0 %v345
  %392 = vmatprep.subr.mxu0 0.0
  %393 = vmatpush1.msra.mxu0 %v343
  %394 = vmatprep.subr.mxu0 0.0
  %395 = vmatpush1.msra.mxu0 %v341
  %396 = vmatprep.subr.mxu0 0.0
  %397 = vmatpush2.msra.mxu0 0.0
  %398 = vmatprep.subr.mxu0 0.0
  %399 = vmatpush2.msra.mxu0 0.0
  %400 = vmatprep.subr.mxu0 0.0
  %401 = vmatpush2.msra.mxu0 0.0
  %402 = vmatprep.subr.mxu0 0.0
  %403 = vmatpush2.msra.mxu0 0.0
  %404 = vmatprep.subr.mxu0 0.0
  %405 = vmatpush2.msra.mxu0 0.0
  %406 = vmatprep.subr.mxu0 0.0
  %407 = vmatpush2.msra.mxu0 0.0
  %408 = vmatprep.subr.mxu0 0.0
  %409 = vmatpush2.msra.mxu0 0.0
  %410 = vmatprep.subr.mxu0 0.0
  %411 = vmatpush2.msra.mxu0 0.0
  %412 = vmatprep.subr.mxu0 0.0
  %413 = vmatpush2.msra.mxu0 0.0
  %414 = vmatprep.subr.mxu0 0.0
  %415 = vmatpush2.msra.mxu0 0.0
  %416 = vmatprep.subr.mxu0 0.0
  %417 = vmatpush2.msra.mxu0 0.0
  %418 = vmatprep.subr.mxu0 0.0
  %419 = vmatpush2.msra.mxu0 0.0
  %420 = vmatprep.subr.mxu0 0.0
  %421 = vmatpush2.msra.mxu0 0.0
  %422 = vmatprep.subr.mxu0 0.0
  %423 = vmatpush2.msra.mxu0 0.0
  %424 = vmatprep.subr.mxu0 0.0
  %425 = vmatpush2.msra.mxu0 0.0
  %426 = vmatprep.subr.mxu0 0.0
  %427 = vmatpush2.msra.mxu0 0.0
  %428 = vmatprep.mubr.f32.mxu0 0.0
  %429 = vmatmul.mubr.f32.gmra.mxu0 %v353
  %v430 = vpop.f32.mrf.mxu0
  %v431 = vadd.f32 0.0, %v430
  %v432 = vpop.f32.mrf.mxu0
  %433 = vmatprep.mubr.f32.mxu0 0.0
  %434 = vmatmul.mubr.f32.gmra.mxu0 %v356
  %v435 = vpop.f32.mrf.mxu0
  %v436 = vadd.f32 0.0, %v435
  %v437 = vpop.f32.mrf.mxu0
  %438 = vmatprep.mubr.f32.mxu0 0.0
  %439 = vmatmul.mubr.f32.gmra.mxu0 %v359
  %v440 = vpop.f32.mrf.mxu0
  %v441 = vadd.f32 0.0, %v440
  %v442 = vpop.f32.mrf.mxu0
  %443 = vmatprep.mubr.f32.mxu0 0.0
  %444 = vmatmul.mubr.f32.gmra.mxu0 %v362
  %v445 = vpop.f32.mrf.mxu0
  %v446 = vadd.f32 0.0, %v445
  %v447 = vpop.f32.mrf.mxu0
  %448 = vdwg.mxu0
  %449 = vrot.lane.b32.xlu0 %v174, 112
  %v450 = vpop.permute.xlu0 %449
  %451 = vrot.lane.b32.xlu0 %v175, 112
  %v452 = vpop.permute.xlu0 %451
  %453 = vrot.lane.b32.xlu0 %v176, 112
  %v454 = vpop.permute.xlu0 %453
  %455 = vrot.lane.b32.xlu0 %v177, 112
  %v456 = vpop.permute.xlu0 %455
  %457 = vrot.lane.b32.xlu0 %v152, 80
  %v458 = vpop.permute.xlu0 %457
  %459 = vrot.lane.b32.xlu0 %v157, 80
  %v460 = vpop.permute.xlu0 %459
  %461 = vrot.lane.b32.xlu0 %v162, 80
  %v462 = vpop.permute.xlu0 %461
  %463 = vrot.lane.b32.xlu0 %v167, 80
  %v464 = vpop.permute.xlu0 %463
  %v465 = vsel %vm190, %v450, 0
  %v467 = vsel %vm190, %v452, 0
  %v469 = vsel %vm190, %v454, 0
  %v471 = vsel %vm190, %v456, 0
  %v473 = vsel %vm190, %v458, 0
  %v475 = vsel %vm190, %v460, 0
  %v477 = vsel %vm190, %v462, 0
  %v479 = vsel %vm190, %v464, 0
  %481 = vmatprep.subr.mxu0 0.0
  %482 = vmatpush1.xpose.msra.mxu0 0.0
  %483 = vmatprep.subr.mxu0 0.0
  %484 = vmatpush1.xpose.msra.mxu0 0.0
  %485 = vmatprep.subr.mxu0 0.0
  %486 = vmatpush1.xpose.msra.mxu0 0.0
  %487 = vmatprep.subr.mxu0 0.0
  %488 = vmatpush1.xpose.msra.mxu0 0.0
  %489 = vmatprep.subr.mxu0 0.0
  %490 = vmatpush1.xpose.msra.mxu0 0.0
  %491 = vmatprep.subr.mxu0 0.0
  %492 = vmatpush1.xpose.msra.mxu0 0.0
  %493 = vmatprep.subr.mxu0 0.0
  %494 = vmatpush1.xpose.msra.mxu0 0.0
  %495 = vmatprep.subr.mxu0 0.0
  %496 = vmatpush1.xpose.msra.mxu0 0.0
  %497 = vmatprep.subr.mxu0 0.0
  %498 = vmatpush1.xpose.msra.mxu0 0.0
  %499 = vmatprep.subr.mxu0 0.0
  %500 = vmatpush1.xpose.msra.mxu0 0.0
  %501 = vmatprep.subr.mxu0 0.0
  %502 = vmatpush1.xpose.msra.mxu0 0.0
  %503 = vmatprep.subr.mxu0 0.0
  %504 = vmatpush1.xpose.msra.mxu0 0.0
  %505 = vmatprep.subr.mxu0 0.0
  %506 = vmatpush1.xpose.msra.mxu0 %v479
  %507 = vmatprep.subr.mxu0 0.0
  %508 = vmatpush1.xpose.msra.mxu0 %v477
  %509 = vmatprep.subr.mxu0 0.0
  %510 = vmatpush1.xpose.msra.mxu0 %v475
  %511 = vmatprep.subr.mxu0 0.0
  %512 = vmatpush1.xpose.msra.mxu0 %v473
  %513 = vmatprep.subr.mxu0 0.0
  %514 = vmatpush2.xpose.msra.mxu0 0.0
  %515 = vmatprep.subr.mxu0 0.0
  %516 = vmatpush2.xpose.msra.mxu0 0.0
  %517 = vmatprep.subr.mxu0 0.0
  %518 = vmatpush2.xpose.msra.mxu0 0.0
  %519 = vmatprep.subr.mxu0 0.0
  %520 = vmatpush2.xpose.msra.mxu0 0.0
  %521 = vmatprep.subr.mxu0 0.0
  %522 = vmatpush2.xpose.msra.mxu0 0.0
  %523 = vmatprep.subr.mxu0 0.0
  %524 = vmatpush2.xpose.msra.mxu0 0.0
  %525 = vmatprep.subr.mxu0 0.0
  %526 = vmatpush2.xpose.msra.mxu0 0.0
  %527 = vmatprep.subr.mxu0 0.0
  %528 = vmatpush2.xpose.msra.mxu0 0.0
  %529 = vmatprep.subr.mxu0 0.0
  %530 = vmatpush2.xpose.msra.mxu0 0.0
  %531 = vmatprep.subr.mxu0 0.0
  %532 = vmatpush2.xpose.msra.mxu0 0.0
  %533 = vmatprep.subr.mxu0 0.0
  %534 = vmatpush2.xpose.msra.mxu0 0.0
  %535 = vmatprep.subr.mxu0 0.0
  %536 = vmatpush2.xpose.msra.mxu0 0.0
  %537 = vmatprep.subr.mxu0 0.0
  %538 = vmatpush2.xpose.msra.mxu0 0.0
  %539 = vmatprep.subr.mxu0 0.0
  %540 = vmatpush2.xpose.msra.mxu0 0.0
  %541 = vmatprep.subr.mxu0 0.0
  %542 = vmatpush2.xpose.msra.mxu0 0.0
  %543 = vmatprep.subr.mxu0 0.0
  %544 = vmatpush2.xpose.msra.mxu0 0.0
  %545 = vmatprep.mubr.f32.mxu0 0.0
  %546 = vmatmul.mubr.f32.gmra.mxu0 %v465
  %v547 = vpop.f32.mrf.mxu0
  %v548 = vadd.f32 %v57, %v547
  %v549 = vpop.f32.mrf.mxu0
  %550 = vmatprep.mubr.f32.mxu0 0.0
  %551 = vmatmul.mubr.f32.gmra.mxu0 %v467
  %v552 = vpop.f32.mrf.mxu0
  %v553 = vadd.f32 %v58, %v552
  %v554 = vpop.f32.mrf.mxu0
  %555 = vmatprep.mubr.f32.mxu0 0.0
  %556 = vmatmul.mubr.f32.gmra.mxu0 %v469
  %v557 = vpop.f32.mrf.mxu0
  %v558 = vadd.f32 %v59, %v557
  %v559 = vpop.f32.mrf.mxu0
  %560 = vmatprep.mubr.f32.mxu0 0.0
  %561 = vmatmul.mubr.f32.gmra.mxu0 %v471
  %v562 = vpop.f32.mrf.mxu0
  %v563 = vadd.f32 %v60, %v562
  %v564 = vpop.f32.mrf.mxu0
  %565 = vdwg.mxu0
  %v566 = vsel %vm72, %v548, -inf
  %567 = vmax.xlane.f32.xlu0 %v566
  %v568 = vpop.xlane.xlu0 %567
  %v569 = vsel %vm72, %v553, -inf
  %570 = vmax.xlane.f32.xlu0 %v569
  %v571 = vpop.xlane.xlu0 %570
  %v572 = vsel %vm72, %v558, -inf
  %573 = vmax.xlane.f32.xlu0 %v572
  %v574 = vpop.xlane.xlu0 %573
  %v575 = vsel %vm72, %v563, -inf
  %576 = vmax.xlane.f32.xlu0 %v575
  %v577 = vpop.xlane.xlu0 %576
  %v578 = vsub.f32 %v548, %v568
  %v579 = vsub.f32 %v553, %v571
  %v580 = vsub.f32 %v558, %v574
  %v581 = vsub.f32 %v563, %v577
  %v582 = vmul.f32 %v578, 1.442695
  %v583 = vpow.pop %v582
  %v584 = vmul.f32 %v579, 1.442695
  %v585 = vpow.pop %v584
  %v586 = vmul.f32 %v580, 1.442695
  %v587 = vpow.pop %v586
  %v588 = vmul.f32 %v581, 1.442695
  %v589 = vpow.pop %v588
  %v590 = vsel %vm72, %v583, 0.0
  %591 = vadd.xlane.f32.xlu0 %v590
  %v592 = vpop.xlane.xlu0 %591
  %v593 = vsel %vm72, %v585, 0.0
  %594 = vadd.xlane.f32.xlu0 %v593
  %v595 = vpop.xlane.xlu0 %594
  %v596 = vsel %vm72, %v587, 0.0
  %597 = vadd.xlane.f32.xlu0 %v596
  %v598 = vpop.xlane.xlu0 %597
  %v599 = vsel %vm72, %v589, 0.0
  %600 = vadd.xlane.f32.xlu0 %v599
  %v601 = vpop.xlane.xlu0 %600
  %v602 = vrcp.pop %v592
  %v603 = vmul.f32 %v583, %v602
  %v604 = vrcp.pop %v595
  %v605 = vmul.f32 %v585, %v604
  %v606 = vrcp.pop %v598
  %v607 = vmul.f32 %v587, %v606
  %v608 = vrcp.pop %v601
  %v609 = vmul.f32 %v589, %v608
  %610 = vrot.lane.b32.xlu0 %v152, 48
  %v611 = vpop.permute.xlu0 %610
  %612 = vrot.lane.b32.xlu0 %v157, 48
  %v613 = vpop.permute.xlu0 %612
  %614 = vrot.lane.b32.xlu0 %v162, 48
  %v615 = vpop.permute.xlu0 %614
  %616 = vrot.lane.b32.xlu0 %v167, 48
  %v617 = vpop.permute.xlu0 %616
  %v623 = vsel %vm72, %v603, 0
  %v626 = vsel %vm72, %v605, 0
  %v629 = vsel %vm72, %v607, 0
  %v632 = vsel %vm72, %v609, 0
  %634 = vmatprep.subr.mxu0 0.0
  %635 = vmatpush1.msra.mxu0 0.0
  %636 = vmatprep.subr.mxu0 0.0
  %637 = vmatpush1.msra.mxu0 0.0
  %638 = vmatprep.subr.mxu0 0.0
  %639 = vmatpush1.msra.mxu0 0.0
  %640 = vmatprep.subr.mxu0 0.0
  %641 = vmatpush1.msra.mxu0 0.0
  %642 = vmatprep.subr.mxu0 0.0
  %643 = vmatpush1.msra.mxu0 0.0
  %644 = vmatprep.subr.mxu0 0.0
  %645 = vmatpush1.msra.mxu0 0.0
  %646 = vmatprep.subr.mxu0 0.0
  %647 = vmatpush1.msra.mxu0 0.0
  %648 = vmatprep.subr.mxu0 0.0
  %649 = vmatpush1.msra.mxu0 0.0
  %650 = vmatprep.subr.mxu0 0.0
  %651 = vmatpush1.msra.mxu0 0.0
  %652 = vmatprep.subr.mxu0 0.0
  %653 = vmatpush1.msra.mxu0 0.0
  %654 = vmatprep.subr.mxu0 0.0
  %655 = vmatpush1.msra.mxu0 0.0
  %656 = vmatprep.subr.mxu0 0.0
  %657 = vmatpush1.msra.mxu0 0.0
  %658 = vmatprep.subr.mxu0 0.0
  %659 = vmatpush1.msra.mxu0 %v617
  %660 = vmatprep.subr.mxu0 0.0
  %661 = vmatpush1.msra.mxu0 %v615
  %662 = vmatprep.subr.mxu0 0.0
  %663 = vmatpush1.msra.mxu0 %v613
  %664 = vmatprep.subr.mxu0 0.0
  %665 = vmatpush1.msra.mxu0 %v611
  %666 = vmatprep.subr.mxu0 0.0
  %667 = vmatpush2.msra.mxu0 0.0
  %668 = vmatprep.subr.mxu0 0.0
  %669 = vmatpush2.msra.mxu0 0.0
  %670 = vmatprep.subr.mxu0 0.0
  %671 = vmatpush2.msra.mxu0 0.0
  %672 = vmatprep.subr.mxu0 0.0
  %673 = vmatpush2.msra.mxu0 0.0
  %674 = vmatprep.subr.mxu0 0.0
  %675 = vmatpush2.msra.mxu0 0.0
  %676 = vmatprep.subr.mxu0 0.0
  %677 = vmatpush2.msra.mxu0 0.0
  %678 = vmatprep.subr.mxu0 0.0
  %679 = vmatpush2.msra.mxu0 0.0
  %680 = vmatprep.subr.mxu0 0.0
  %681 = vmatpush2.msra.mxu0 0.0
  %682 = vmatprep.subr.mxu0 0.0
  %683 = vmatpush2.msra.mxu0 0.0
  %684 = vmatprep.subr.mxu0 0.0
  %685 = vmatpush2.msra.mxu0 0.0
  %686 = vmatprep.subr.mxu0 0.0
  %687 = vmatpush2.msra.mxu0 0.0
  %688 = vmatprep.subr.mxu0 0.0
  %689 = vmatpush2.msra.mxu0 0.0
  %690 = vmatprep.subr.mxu0 0.0
  %691 = vmatpush2.msra.mxu0 0.0
  %692 = vmatprep.subr.mxu0 0.0
  %693 = vmatpush2.msra.mxu0 0.0
  %694 = vmatprep.subr.mxu0 0.0
  %695 = vmatpush2.msra.mxu0 0.0
  %696 = vmatprep.subr.mxu0 0.0
  %697 = vmatpush2.msra.mxu0 0.0
  %698 = vmatprep.mubr.f32.mxu0 0.0
  %699 = vmatmul.mubr.f32.gmra.mxu0 %v623
  %v700 = vpop.f32.mrf.mxu0
  %v701 = vadd.f32 0.0, %v700
  %v702 = vpop.f32.mrf.mxu0
  %703 = vmatprep.mubr.f32.mxu0 0.0
  %704 = vmatmul.mubr.f32.gmra.mxu0 %v626
  %v705 = vpop.f32.mrf.mxu0
  %v706 = vadd.f32 0.0, %v705
  %v707 = vpop.f32.mrf.mxu0
  %708 = vmatprep.mubr.f32.mxu0 0.0
  %709 = vmatmul.mubr.f32.gmra.mxu0 %v629
  %v710 = vpop.f32.mrf.mxu0
  %v711 = vadd.f32 0.0, %v710
  %v712 = vpop.f32.mrf.mxu0
  %713 = vmatprep.mubr.f32.mxu0 0.0
  %714 = vmatmul.mubr.f32.gmra.mxu0 %v632
  %v715 = vpop.f32.mrf.mxu0
  %v716 = vadd.f32 0.0, %v715
  %v717 = vpop.f32.mrf.mxu0
  %718 = vdwg.mxu0
  %v720 = vsel %vm190, %v701, 0
  %v723 = vsel %vm190, %v706, 0
  %v726 = vsel %vm190, %v711, 0
  %v729 = vsel %vm190, %v716, 0
  %731 = vmatprep.subr.mxu0 0.0
  %732 = vmatpush1.msra.mxu0 0.0
  %733 = vmatprep.subr.mxu0 0.0
  %734 = vmatpush1.msra.mxu0 0.0
  %735 = vmatprep.subr.mxu0 0.0
  %736 = vmatpush1.msra.mxu0 0.0
  %737 = vmatprep.subr.mxu0 0.0
  %738 = vmatpush1.msra.mxu0 0.0
  %739 = vmatprep.subr.mxu0 0.0
  %740 = vmatpush1.msra.mxu0 0.0
  %741 = vmatprep.subr.mxu0 0.0
  %742 = vmatpush1.msra.mxu0 0.0
  %743 = vmatprep.subr.mxu0 0.0
  %744 = vmatpush1.msra.mxu0 0.0
  %745 = vmatprep.subr.mxu0 0.0
  %746 = vmatpush1.msra.mxu0 0.0
  %747 = vmatprep.subr.mxu0 0.0
  %748 = vmatpush1.msra.mxu0 0.0
  %749 = vmatprep.subr.mxu0 0.0
  %750 = vmatpush1.msra.mxu0 0.0
  %751 = vmatprep.subr.mxu0 0.0
  %752 = vmatpush1.msra.mxu0 0.0
  %753 = vmatprep.subr.mxu0 0.0
  %754 = vmatpush1.msra.mxu0 0.0
  %755 = vmatprep.subr.mxu0 0.0
  %756 = vmatpush1.msra.mxu0 0.0
  %757 = vmatprep.subr.mxu0 0.0
  %758 = vmatpush1.msra.mxu0 0.0
  %759 = vmatprep.subr.mxu0 0.0
  %760 = vmatpush1.msra.mxu0 %v173
  %761 = vmatprep.subr.mxu0 0.0
  %762 = vmatpush1.msra.mxu0 %v172
  %763 = vmatprep.subr.mxu0 0.0
  %764 = vmatpush2.msra.mxu0 0.0
  %765 = vmatprep.subr.mxu0 0.0
  %766 = vmatpush2.msra.mxu0 0.0
  %767 = vmatprep.subr.mxu0 0.0
  %768 = vmatpush2.msra.mxu0 0.0
  %769 = vmatprep.subr.mxu0 0.0
  %770 = vmatpush2.msra.mxu0 0.0
  %771 = vmatprep.subr.mxu0 0.0
  %772 = vmatpush2.msra.mxu0 0.0
  %773 = vmatprep.subr.mxu0 0.0
  %774 = vmatpush2.msra.mxu0 0.0
  %775 = vmatprep.subr.mxu0 0.0
  %776 = vmatpush2.msra.mxu0 0.0
  %777 = vmatprep.subr.mxu0 0.0
  %778 = vmatpush2.msra.mxu0 0.0
  %779 = vmatprep.subr.mxu0 0.0
  %780 = vmatpush2.msra.mxu0 0.0
  %781 = vmatprep.subr.mxu0 0.0
  %782 = vmatpush2.msra.mxu0 0.0
  %783 = vmatprep.subr.mxu0 0.0
  %784 = vmatpush2.msra.mxu0 0.0
  %785 = vmatprep.subr.mxu0 0.0
  %786 = vmatpush2.msra.mxu0 0.0
  %787 = vmatprep.subr.mxu0 0.0
  %788 = vmatpush2.msra.mxu0 0.0
  %789 = vmatprep.subr.mxu0 0.0
  %790 = vmatpush2.msra.mxu0 0.0
  %791 = vmatprep.subr.mxu0 0.0
  %792 = vmatpush2.msra.mxu0 0.0
  %793 = vmatprep.subr.mxu0 0.0
  %794 = vmatpush2.msra.mxu0 0.0
  %795 = vmatprep.mubr.f32.mxu0 0.0
  %796 = vmatmul.mubr.f32.gmra.mxu0 %v720
  %v797 = vpop.f32.mrf.mxu0
  %v798 = vadd.f32 0.0, %v797
  %v799 = vpop.f32.mrf.mxu0
  %800 = vmatprep.mubr.f32.mxu0 0.0
  %801 = vmatmul.mubr.f32.gmra.mxu0 %v723
  %v802 = vpop.f32.mrf.mxu0
  %v803 = vadd.f32 0.0, %v802
  %v804 = vpop.f32.mrf.mxu0
  %805 = vmatprep.mubr.f32.mxu0 0.0
  %806 = vmatmul.mubr.f32.gmra.mxu0 %v726
  %v807 = vpop.f32.mrf.mxu0
  %v808 = vadd.f32 0.0, %v807
  %v809 = vpop.f32.mrf.mxu0
  %810 = vmatprep.mubr.f32.mxu0 0.0
  %811 = vmatmul.mubr.f32.gmra.mxu0 %v729
  %v812 = vpop.f32.mrf.mxu0
  %v813 = vadd.f32 0.0, %v812
  %v814 = vpop.f32.mrf.mxu0
  %815 = vdwg.mxu0
  %v817 = vsel %vm190, %v431, 0
  %v820 = vsel %vm190, %v436, 0
  %v823 = vsel %vm190, %v441, 0
  %v826 = vsel %vm190, %v446, 0
  %828 = vmatprep.subr.mxu0 0.0
  %829 = vmatpush1.msra.mxu0 0.0
  %830 = vmatprep.subr.mxu0 0.0
  %831 = vmatpush1.msra.mxu0 0.0
  %832 = vmatprep.subr.mxu0 0.0
  %833 = vmatpush1.msra.mxu0 0.0
  %834 = vmatprep.subr.mxu0 0.0
  %835 = vmatpush1.msra.mxu0 0.0
  %836 = vmatprep.subr.mxu0 0.0
  %837 = vmatpush1.msra.mxu0 0.0
  %838 = vmatprep.subr.mxu0 0.0
  %839 = vmatpush1.msra.mxu0 0.0
  %840 = vmatprep.subr.mxu0 0.0
  %841 = vmatpush1.msra.mxu0 0.0
  %842 = vmatprep.subr.mxu0 0.0
  %843 = vmatpush1.msra.mxu0 0.0
  %844 = vmatprep.subr.mxu0 0.0
  %845 = vmatpush1.msra.mxu0 0.0
  %846 = vmatprep.subr.mxu0 0.0
  %847 = vmatpush1.msra.mxu0 0.0
  %848 = vmatprep.subr.mxu0 0.0
  %849 = vmatpush1.msra.mxu0 0.0
  %850 = vmatprep.subr.mxu0 0.0
  %851 = vmatpush1.msra.mxu0 0.0
  %852 = vmatprep.subr.mxu0 0.0
  %853 = vmatpush1.msra.mxu0 0.0
  %854 = vmatprep.subr.mxu0 0.0
  %855 = vmatpush1.msra.mxu0 0.0
  %856 = vmatprep.subr.mxu0 0.0
  %857 = vmatpush1.msra.mxu0 %v171
  %858 = vmatprep.subr.mxu0 0.0
  %859 = vmatpush1.msra.mxu0 %v170
  %860 = vmatprep.subr.mxu0 0.0
  %861 = vmatpush2.msra.mxu0 0.0
  %862 = vmatprep.subr.mxu0 0.0
  %863 = vmatpush2.msra.mxu0 0.0
  %864 = vmatprep.subr.mxu0 0.0
  %865 = vmatpush2.msra.mxu0 0.0
  %866 = vmatprep.subr.mxu0 0.0
  %867 = vmatpush2.msra.mxu0 0.0
  %868 = vmatprep.subr.mxu0 0.0
  %869 = vmatpush2.msra.mxu0 0.0
  %870 = vmatprep.subr.mxu0 0.0
  %871 = vmatpush2.msra.mxu0 0.0
  %872 = vmatprep.subr.mxu0 0.0
  %873 = vmatpush2.msra.mxu0 0.0
  %874 = vmatprep.subr.mxu0 0.0
  %875 = vmatpush2.msra.mxu0 0.0
  %876 = vmatprep.subr.mxu0 0.0
  %877 = vmatpush2.msra.mxu0 0.0
  %878 = vmatprep.subr.mxu0 0.0
  %879 = vmatpush2.msra.mxu0 0.0
  %880 = vmatprep.subr.mxu0 0.0
  %881 = vmatpush2.msra.mxu0 0.0
  %882 = vmatprep.subr.mxu0 0.0
  %883 = vmatpush2.msra.mxu0 0.0
  %884 = vmatprep.subr.mxu0 0.0
  %885 = vmatpush2.msra.mxu0 0.0
  %886 = vmatprep.subr.mxu0 0.0
  %887 = vmatpush2.msra.mxu0 0.0
  %888 = vmatprep.subr.mxu0 0.0
  %889 = vmatpush2.msra.mxu0 0.0
  %890 = vmatprep.subr.mxu0 0.0
  %891 = vmatpush2.msra.mxu0 0.0
  %892 = vmatprep.mubr.f32.mxu0 0.0
  %893 = vmatmul.mubr.f32.gmra.mxu0 %v817
  %v894 = vpop.f32.mrf.mxu0
  %v895 = vadd.f32 %v798, %v894
  %v896 = vpop.f32.mrf.mxu0
  %897 = vmatprep.mubr.f32.mxu0 0.0
  %898 = vmatmul.mubr.f32.gmra.mxu0 %v820
  %v899 = vpop.f32.mrf.mxu0
  %v900 = vadd.f32 %v803, %v899
  %v901 = vpop.f32.mrf.mxu0
  %902 = vmatprep.mubr.f32.mxu0 0.0
  %903 = vmatmul.mubr.f32.gmra.mxu0 %v823
  %v904 = vpop.f32.mrf.mxu0
  %v905 = vadd.f32 %v808, %v904
  %v906 = vpop.f32.mrf.mxu0
  %907 = vmatprep.mubr.f32.mxu0 0.0
  %908 = vmatmul.mubr.f32.gmra.mxu0 %v826
  %v909 = vpop.f32.mrf.mxu0
  %v910 = vadd.f32 %v813, %v909
  %v911 = vpop.f32.mrf.mxu0
  %912 = vdwg.mxu0
  %v913 = vld [vmem:[%s5] sm:$0x1]
  %v915 = vlaneseq
  %v916 = vshrl.u32 %v915, 7
  %v917 = vsub.s32 0, %v916
  %v918 = vrot.slane %v913, %v917
  %v920 = vadd.f32 %v895, %v918
  %v921 = vadd.f32 %v900, %v918
  %v922 = vadd.f32 %v905, %v918
  %v923 = vadd.f32 %v910, %v918
  %v924 = vadd.f32 %v53, %v920
  %v925 = vadd.f32 %v54, %v921
  %v926 = vadd.f32 %v55, %v922
  %v927 = vadd.f32 %v56, %v923
  %v928 = vld [vmem:[%s6] sm:$0x1]
  %v929 = vld [vmem:[%s7] sm:$0x1]
  %v930 = vsel %vm72, %v924, 0.0
  %931 = vadd.xlane.f32.xlu0 %v930
  %v932 = vpop.xlane.xlu0 %931
  %v933 = vsel %vm72, %v925, 0.0
  %934 = vadd.xlane.f32.xlu0 %v933
  %v935 = vpop.xlane.xlu0 %934
  %v936 = vsel %vm72, %v926, 0.0
  %937 = vadd.xlane.f32.xlu0 %v936
  %v938 = vpop.xlane.xlu0 %937
  %v939 = vsel %vm72, %v927, 0.0
  %940 = vadd.xlane.f32.xlu0 %v939
  %v941 = vpop.xlane.xlu0 %940
  %v942 = vrcp.pop 32.0
  %v943 = vmul.f32 %v932, %v942
  %v944 = vmul.f32 %v935, %v942
  %v945 = vmul.f32 %v938, %v942
  %v946 = vmul.f32 %v941, %v942
  %v947 = vsub.f32 %v924, %v943
  %v948 = vsub.f32 %v925, %v944
  %v949 = vsub.f32 %v926, %v945
  %v950 = vsub.f32 %v927, %v946
  %v951 = vmul.f32 %v947, %v947
  %v952 = vmul.f32 %v948, %v948
  %v953 = vmul.f32 %v949, %v949
  %v954 = vmul.f32 %v950, %v950
  %v955 = vsel %vm72, %v951, 0.0
  %956 = vadd.xlane.f32.xlu0 %v955
  %v957 = vpop.xlane.xlu0 %956
  %v958 = vsel %vm72, %v952, 0.0
  %959 = vadd.xlane.f32.xlu0 %v958
  %v960 = vpop.xlane.xlu0 %959
  %v961 = vsel %vm72, %v953, 0.0
  %962 = vadd.xlane.f32.xlu0 %v961
  %v963 = vpop.xlane.xlu0 %962
  %v964 = vsel %vm72, %v954, 0.0
  %965 = vadd.xlane.f32.xlu0 %v964
  %v966 = vpop.xlane.xlu0 %965
  %v967 = vmul.f32 %v957, %v942
  %v968 = vmul.f32 %v960, %v942
  %v969 = vmul.f32 %v963, %v942
  %v970 = vmul.f32 %v966, %v942
  %v971 = vadd.f32 %v967, 1e-05
  %v972 = vadd.f32 %v968, 1e-05
  %v973 = vadd.f32 %v969, 1e-05
  %v974 = vadd.f32 %v970, 1e-05
  %v975 = vrsqrt.pop %v971
  %v976 = vrsqrt.pop %v972
  %v977 = vrsqrt.pop %v973
  %v978 = vrsqrt.pop %v974
  %v979 = vmul.f32 %v947, %v975
  %v980 = vmul.f32 %v948, %v976
  %v981 = vmul.f32 %v949, %v977
  %v982 = vmul.f32 %v950, %v978
  %v984 = vlaneseq
  %v985 = vshrl.u32 %v984, 7
  %v986 = vsub.s32 0, %v985
  %v987 = vrot.slane %v928, %v986
  %v989 = vmul.f32 %v979, %v987
  %v990 = vmul.f32 %v980, %v987
  %v991 = vmul.f32 %v981, %v987
  %v992 = vmul.f32 %v982, %v987
  %v994 = vlaneseq
  %v995 = vshrl.u32 %v994, 7
  %v996 = vsub.s32 0, %v995
  %v997 = vrot.slane %v929, %v996
  %v999 = vadd.f32 %v989, %v997
  %v1000 = vadd.f32 %v990, %v997
  %v1001 = vadd.f32 %v991, %v997
  %v1002 = vadd.f32 %v992, %v997
  %v1003 = vld [vmem:[%s8] sm:$0xff]
  %v1004 = vld [vmem:[%s8 + $0x8] sm:$0xff]
  %v1005 = vld [vmem:[%s8 + $0x10] sm:$0xff]
  %v1006 = vld [vmem:[%s8 + $0x18] sm:$0xff]
  %v1007 = vld [vmem:[%s9] sm:$0x1]
  %v1009 = vlaneseq
  %v1010 = vshrl.u32 %v1009, 7
  %v1011 = vsub.s32 0, %v1010
  %v1012 = vrot.slane %v1007, %v1011
  %v1015 = vsel %vm72, %v999, 0
  %v1018 = vsel %vm72, %v1000, 0
  %v1021 = vsel %vm72, %v1001, 0
  %v1024 = vsel %vm72, %v1002, 0
  %1026 = vmatprep.subr.mxu0 0.0
  %1027 = vmatpush1.msra.mxu0 0.0
  %1028 = vmatprep.subr.mxu0 0.0
  %1029 = vmatpush1.msra.mxu0 0.0
  %1030 = vmatprep.subr.mxu0 0.0
  %1031 = vmatpush1.msra.mxu0 0.0
  %1032 = vmatprep.subr.mxu0 0.0
  %1033 = vmatpush1.msra.mxu0 0.0
  %1034 = vmatprep.subr.mxu0 0.0
  %1035 = vmatpush1.msra.mxu0 0.0
  %1036 = vmatprep.subr.mxu0 0.0
  %1037 = vmatpush1.msra.mxu0 0.0
  %1038 = vmatprep.subr.mxu0 0.0
  %1039 = vmatpush1.msra.mxu0 0.0
  %1040 = vmatprep.subr.mxu0 0.0
  %1041 = vmatpush1.msra.mxu0 0.0
  %1042 = vmatprep.subr.mxu0 0.0
  %1043 = vmatpush1.msra.mxu0 0.0
  %1044 = vmatprep.subr.mxu0 0.0
  %1045 = vmatpush1.msra.mxu0 0.0
  %1046 = vmatprep.subr.mxu0 0.0
  %1047 = vmatpush1.msra.mxu0 0.0
  %1048 = vmatprep.subr.mxu0 0.0
  %1049 = vmatpush1.msra.mxu0 0.0
  %1050 = vmatprep.subr.mxu0 0.0
  %1051 = vmatpush1.msra.mxu0 %v1006
  %1052 = vmatprep.subr.mxu0 0.0
  %1053 = vmatpush1.msra.mxu0 %v1005
  %1054 = vmatprep.subr.mxu0 0.0
  %1055 = vmatpush1.msra.mxu0 %v1004
  %1056 = vmatprep.subr.mxu0 0.0
  %1057 = vmatpush1.msra.mxu0 %v1003
  %1058 = vmatprep.subr.mxu0 0.0
  %1059 = vmatpush2.msra.mxu0 0.0
  %1060 = vmatprep.subr.mxu0 0.0
  %1061 = vmatpush2.msra.mxu0 0.0
  %1062 = vmatprep.subr.mxu0 0.0
  %1063 = vmatpush2.msra.mxu0 0.0
  %1064 = vmatprep.subr.mxu0 0.0
  %1065 = vmatpush2.msra.mxu0 0.0
  %1066 = vmatprep.subr.mxu0 0.0
  %1067 = vmatpush2.msra.mxu0 0.0
  %1068 = vmatprep.subr.mxu0 0.0
  %1069 = vmatpush2.msra.mxu0 0.0
  %1070 = vmatprep.subr.mxu0 0.0
  %1071 = vmatpush2.msra.mxu0 0.0
  %1072 = vmatprep.subr.mxu0 0.0
  %1073 = vmatpush2.msra.mxu0 0.0
  %1074 = vmatprep.subr.mxu0 0.0
  %1075 = vmatpush2.msra.mxu0 0.0
  %1076 = vmatprep.subr.mxu0 0.0
  %1077 = vmatpush2.msra.mxu0 0.0
  %1078 = vmatprep.subr.mxu0 0.0
  %1079 = vmatpush2.msra.mxu0 0.0
  %1080 = vmatprep.subr.mxu0 0.0
  %1081 = vmatpush2.msra.mxu0 0.0
  %1082 = vmatprep.subr.mxu0 0.0
  %1083 = vmatpush2.msra.mxu0 0.0
  %1084 = vmatprep.subr.mxu0 0.0
  %1085 = vmatpush2.msra.mxu0 0.0
  %1086 = vmatprep.subr.mxu0 0.0
  %1087 = vmatpush2.msra.mxu0 0.0
  %1088 = vmatprep.subr.mxu0 0.0
  %1089 = vmatpush2.msra.mxu0 0.0
  %1090 = vmatprep.mubr.f32.mxu0 0.0
  %1091 = vmatmul.mubr.f32.gmra.mxu0 %v1015
  %v1092 = vpop.f32.mrf.mxu0
  %v1093 = vadd.f32 %v1012, %v1092
  %v1094 = vpop.f32.mrf.mxu0
  %1095 = vmatprep.mubr.f32.mxu0 0.0
  %1096 = vmatmul.mubr.f32.gmra.mxu0 %v1018
  %v1097 = vpop.f32.mrf.mxu0
  %v1098 = vadd.f32 %v1012, %v1097
  %v1099 = vpop.f32.mrf.mxu0
  %1100 = vmatprep.mubr.f32.mxu0 0.0
  %1101 = vmatmul.mubr.f32.gmra.mxu0 %v1021
  %v1102 = vpop.f32.mrf.mxu0
  %v1103 = vadd.f32 %v1012, %v1102
  %v1104 = vpop.f32.mrf.mxu0
  %1105 = vmatprep.mubr.f32.mxu0 0.0
  %1106 = vmatmul.mubr.f32.gmra.mxu0 %v1024
  %v1107 = vpop.f32.mrf.mxu0
  %v1108 = vadd.f32 %v1012, %v1107
  %v1109 = vpop.f32.mrf.mxu0
  %1110 = vdwg.mxu0
  %v1111 = vmax.f32 %v1093, 0.0
  %v1112 = vmax.f32 %v1098, 0.0
  %v1113 = vmax.f32 %v1103, 0.0
  %v1114 = vmax.f32 %v1108, 0.0
  %v1115 = vld [vmem:[%s10] sm:$0xff]
  %v1116 = vld [vmem:[%s10 + $0x8] sm:$0xff]
  %v1117 = vld [vmem:[%s10 + $0x10] sm:$0xff]
  %v1118 = vld [vmem:[%s10 + $0x18] sm:$0xff]
  %v1119 = vld [vmem:[%s10 + $0x20] sm:$0xff]
  %v1120 = vld [vmem:[%s10 + $0x28] sm:$0xff]
  %v1121 = vld [vmem:[%s10 + $0x30] sm:$0xff]
  %v1122 = vld [vmem:[%s10 + $0x38] sm:$0xff]
  %v1123 = vld [vmem:[%s10 + $0x40] sm:$0xff]
  %v1124 = vld [vmem:[%s10 + $0x48] sm:$0xff]
  %v1125 = vld [vmem:[%s10 + $0x50] sm:$0xff]
  %v1126 = vld [vmem:[%s10 + $0x58] sm:$0xff]
  %v1127 = vld [vmem:[%s10 + $0x60] sm:$0xff]
  %v1128 = vld [vmem:[%s10 + $0x68] sm:$0xff]
  %v1129 = vld [vmem:[%s10 + $0x70] sm:$0xff]
  %v1130 = vld [vmem:[%s10 + $0x78] sm:$0xff]
  %v1131 = vld [vmem:[%s11] sm:$0x1]
  %v1133 = vlaneseq
  %v1134 = vshrl.u32 %v1133, 7
  %v1135 = vsub.s32 0, %v1134
  %v1136 = vrot.slane %v1131, %v1135
  %1138 = vmatprep.subr.mxu0 0.0
  %1139 = vmatpush1.msra.mxu0 %v1130
  %1140 = vmatprep.subr.mxu0 0.0
  %1141 = vmatpush1.msra.mxu0 %v1129
  %1142 = vmatprep.subr.mxu0 0.0
  %1143 = vmatpush1.msra.mxu0 %v1128
  %1144 = vmatprep.subr.mxu0 0.0
  %1145 = vmatpush1.msra.mxu0 %v1127
  %1146 = vmatprep.subr.mxu0 0.0
  %1147 = vmatpush1.msra.mxu0 %v1126
  %1148 = vmatprep.subr.mxu0 0.0
  %1149 = vmatpush1.msra.mxu0 %v1125
  %1150 = vmatprep.subr.mxu0 0.0
  %1151 = vmatpush1.msra.mxu0 %v1124
  %1152 = vmatprep.subr.mxu0 0.0
  %1153 = vmatpush1.msra.mxu0 %v1123
  %1154 = vmatprep.subr.mxu0 0.0
  %1155 = vmatpush1.msra.mxu0 %v1122
  %1156 = vmatprep.subr.mxu0 0.0
  %1157 = vmatpush1.msra.mxu0 %v1121
  %1158 = vmatprep.subr.mxu0 0.0
  %1159 = vmatpush1.msra.mxu0 %v1120
  %1160 = vmatprep.subr.mxu0 0.0
  %1161 = vmatpush1.msra.mxu0 %v1119
  %1162 = vmatprep.subr.mxu0 0.0
  %1163 = vmatpush1.msra.mxu0 %v1118
  %1164 = vmatprep.subr.mxu0 0.0
  %1165 = vmatpush1.msra.mxu0 %v1117
  %1166 = vmatprep.subr.mxu0 0.0
  %1167 = vmatpush1.msra.mxu0 %v1116
  %1168 = vmatprep.subr.mxu0 0.0
  %1169 = vmatpush1.msra.mxu0 %v1115
  %1170 = vmatprep.subr.mxu0 0.0
  %1171 = vmatpush2.msra.mxu0 0.0
  %1172 = vmatprep.subr.mxu0 0.0
  %1173 = vmatpush2.msra.mxu0 0.0
  %1174 = vmatprep.subr.mxu0 0.0
  %1175 = vmatpush2.msra.mxu0 0.0
  %1176 = vmatprep.subr.mxu0 0.0
  %1177 = vmatpush2.msra.mxu0 0.0
  %1178 = vmatprep.subr.mxu0 0.0
  %1179 = vmatpush2.msra.mxu0 0.0
  %1180 = vmatprep.subr.mxu0 0.0
  %1181 = vmatpush2.msra.mxu0 0.0
  %1182 = vmatprep.subr.mxu0 0.0
  %1183 = vmatpush2.msra.mxu0 0.0
  %1184 = vmatprep.subr.mxu0 0.0
  %1185 = vmatpush2.msra.mxu0 0.0
  %1186 = vmatprep.subr.mxu0 0.0
  %1187 = vmatpush2.msra.mxu0 0.0
  %1188 = vmatprep.subr.mxu0 0.0
  %1189 = vmatpush2.msra.mxu0 0.0
  %1190 = vmatprep.subr.mxu0 0.0
  %1191 = vmatpush2.msra.mxu0 0.0
  %1192 = vmatprep.subr.mxu0 0.0
  %1193 = vmatpush2.msra.mxu0 0.0
  %1194 = vmatprep.subr.mxu0 0.0
  %1195 = vmatpush2.msra.mxu0 0.0
  %1196 = vmatprep.subr.mxu0 0.0
  %1197 = vmatpush2.msra.mxu0 0.0
  %1198 = vmatprep.subr.mxu0 0.0
  %1199 = vmatpush2.msra.mxu0 0.0
  %1200 = vmatprep.subr.mxu0 0.0
  %1201 = vmatpush2.msra.mxu0 0.0
  %1202 = vmatprep.mubr.f32.mxu0 0.0
  %1203 = vmatmul.mubr.f32.gmra.mxu0 %v1111
  %v1204 = vpop.f32.mrf.mxu0
  %v1205 = vadd.f32 %v1136, %v1204
  %v1206 = vpop.f32.mrf.mxu0
  %1207 = vmatprep.mubr.f32.mxu0 0.0
  %1208 = vmatmul.mubr.f32.gmra.mxu0 %v1112
  %v1209 = vpop.f32.mrf.mxu0
  %v1210 = vadd.f32 %v1136, %v1209
  %v1211 = vpop.f32.mrf.mxu0
  %1212 = vmatprep.mubr.f32.mxu0 0.0
  %1213 = vmatmul.mubr.f32.gmra.mxu0 %v1113
  %v1214 = vpop.f32.mrf.mxu0
  %v1215 = vadd.f32 %v1136, %v1214
  %v1216 = vpop.f32.mrf.mxu0
  %1217 = vmatprep.mubr.f32.mxu0 0.0
  %1218 = vmatmul.mubr.f32.gmra.mxu0 %v1114
  %v1219 = vpop.f32.mrf.mxu0
  %v1220 = vadd.f32 %v1136, %v1219
  %v1221 = vpop.f32.mrf.mxu0
  %1222 = vdwg.mxu0
  %v1223 = vadd.f32 %v999, %v1205
  %v1224 = vadd.f32 %v1000, %v1210
  %v1225 = vadd.f32 %v1001, %v1215
  %v1226 = vadd.f32 %v1002, %v1220
  %v1227 = vld [vmem:[%s12] sm:$0x1]
  %v1228 = vld [vmem:[%s13] sm:$0x1]
  %v1229 = vsel %vm72, %v1223, 0.0
  %1230 = vadd.xlane.f32.xlu0 %v1229
  %v1231 = vpop.xlane.xlu0 %1230
  %v1232 = vsel %vm72, %v1224, 0.0
  %1233 = vadd.xlane.f32.xlu0 %v1232
  %v1234 = vpop.xlane.xlu0 %1233
  %v1235 = vsel %vm72, %v1225, 0.0
  %1236 = vadd.xlane.f32.xlu0 %v1235
  %v1237 = vpop.xlane.xlu0 %1236
  %v1238 = vsel %vm72, %v1226, 0.0
  %1239 = vadd.xlane.f32.xlu0 %v1238
  %v1240 = vpop.xlane.xlu0 %1239
  %v1241 = vmul.f32 %v1231, %v942
  %v1242 = vmul.f32 %v1234, %v942
  %v1243 = vmul.f32 %v1237, %v942
  %v1244 = vmul.f32 %v1240, %v942
  %v1245 = vsub.f32 %v1223, %v1241
  %v1246 = vsub.f32 %v1224, %v1242
  %v1247 = vsub.f32 %v1225, %v1243
  %v1248 = vsub.f32 %v1226, %v1244
  %v1249 = vmul.f32 %v1245, %v1245
  %v1250 = vmul.f32 %v1246, %v1246
  %v1251 = vmul.f32 %v1247, %v1247
  %v1252 = vmul.f32 %v1248, %v1248
  %v1253 = vsel %vm72, %v1249, 0.0
  %1254 = vadd.xlane.f32.xlu0 %v1253
  %v1255 = vpop.xlane.xlu0 %1254
  %v1256 = vsel %vm72, %v1250, 0.0
  %1257 = vadd.xlane.f32.xlu0 %v1256
  %v1258 = vpop.xlane.xlu0 %1257
  %v1259 = vsel %vm72, %v1251, 0.0
  %1260 = vadd.xlane.f32.xlu0 %v1259
  %v1261 = vpop.xlane.xlu0 %1260
  %v1262 = vsel %vm72, %v1252, 0.0
  %1263 = vadd.xlane.f32.xlu0 %v1262
  %v1264 = vpop.xlane.xlu0 %1263
  %v1265 = vmul.f32 %v1255, %v942
  %v1266 = vmul.f32 %v1258, %v942
  %v1267 = vmul.f32 %v1261, %v942
  %v1268 = vmul.f32 %v1264, %v942
  %v1269 = vadd.f32 %v1265, 1e-05
  %v1270 = vadd.f32 %v1266, 1e-05
  %v1271 = vadd.f32 %v1267, 1e-05
  %v1272 = vadd.f32 %v1268, 1e-05
  %v1273 = vrsqrt.pop %v1269
  %v1274 = vrsqrt.pop %v1270
  %v1275 = vrsqrt.pop %v1271
  %v1276 = vrsqrt.pop %v1272
  %v1277 = vmul.f32 %v1245, %v1273
  %v1278 = vmul.f32 %v1246, %v1274
  %v1279 = vmul.f32 %v1247, %v1275
  %v1280 = vmul.f32 %v1248, %v1276
  %v1282 = vlaneseq
  %v1283 = vshrl.u32 %v1282, 7
  %v1284 = vsub.s32 0, %v1283
  %v1285 = vrot.slane %v1227, %v1284
  %v1287 = vmul.f32 %v1277, %v1285
  %v1288 = vmul.f32 %v1278, %v1285
  %v1289 = vmul.f32 %v1279, %v1285
  %v1290 = vmul.f32 %v1280, %v1285
  %v1292 = vlaneseq
  %v1293 = vshrl.u32 %v1292, 7
  %v1294 = vsub.s32 0, %v1293
  %v1295 = vrot.slane %v1228, %v1294
  %v1297 = vadd.f32 %v1287, %v1295
  %v1298 = vadd.f32 %v1288, %v1295
  %v1299 = vadd.f32 %v1289, %v1295
  %v1300 = vadd.f32 %v1290, %v1295
  %s1301 = scalar_lea.vmem %s2, 32
  %v1302 = vld [vmem:[%s1301] sm:$0xff]
  %v1303 = vld [vmem:[%s1301 + $0x8] sm:$0xff]
  %v1304 = vld [vmem:[%s1301 + $0x10] sm:$0xff]
  %v1305 = vld [vmem:[%s1301 + $0x18] sm:$0xff]
  %s1306 = scalar_lea.vmem %s3, 1
  %v1307 = vld [vmem:[%s1306] sm:$0x1]
  %v1309 = vlaneseq
  %v1310 = vshrl.u32 %v1309, 7
  %v1311 = vsub.s32 0, %v1310
  %v1312 = vrot.slane %v1307, %v1311
  %v1315 = vsel %vm72, %v1297, 0
  %v1318 = vsel %vm72, %v1298, 0
  %v1321 = vsel %vm72, %v1299, 0
  %v1324 = vsel %vm72, %v1300, 0
  %1326 = vmatprep.subr.mxu0 0.0
  %1327 = vmatpush1.msra.mxu0 0.0
  %1328 = vmatprep.subr.mxu0 0.0
  %1329 = vmatpush1.msra.mxu0 0.0
  %1330 = vmatprep.subr.mxu0 0.0
  %1331 = vmatpush1.msra.mxu0 0.0
  %1332 = vmatprep.subr.mxu0 0.0
  %1333 = vmatpush1.msra.mxu0 0.0
  %1334 = vmatprep.subr.mxu0 0.0
  %1335 = vmatpush1.msra.mxu0 0.0
  %1336 = vmatprep.subr.mxu0 0.0
  %1337 = vmatpush1.msra.mxu0 0.0
  %1338 = vmatprep.subr.mxu0 0.0
  %1339 = vmatpush1.msra.mxu0 0.0
  %1340 = vmatprep.subr.mxu0 0.0
  %1341 = vmatpush1.msra.mxu0 0.0
  %1342 = vmatprep.subr.mxu0 0.0
  %1343 = vmatpush1.msra.mxu0 0.0
  %1344 = vmatprep.subr.mxu0 0.0
  %1345 = vmatpush1.msra.mxu0 0.0
  %1346 = vmatprep.subr.mxu0 0.0
  %1347 = vmatpush1.msra.mxu0 0.0
  %1348 = vmatprep.subr.mxu0 0.0
  %1349 = vmatpush1.msra.mxu0 0.0
  %1350 = vmatprep.subr.mxu0 0.0
  %1351 = vmatpush1.msra.mxu0 %v1305
  %1352 = vmatprep.subr.mxu0 0.0
  %1353 = vmatpush1.msra.mxu0 %v1304
  %1354 = vmatprep.subr.mxu0 0.0
  %1355 = vmatpush1.msra.mxu0 %v1303
  %1356 = vmatprep.subr.mxu0 0.0
  %1357 = vmatpush1.msra.mxu0 %v1302
  %1358 = vmatprep.subr.mxu0 0.0
  %1359 = vmatpush2.msra.mxu0 0.0
  %1360 = vmatprep.subr.mxu0 0.0
  %1361 = vmatpush2.msra.mxu0 0.0
  %1362 = vmatprep.subr.mxu0 0.0
  %1363 = vmatpush2.msra.mxu0 0.0
  %1364 = vmatprep.subr.mxu0 0.0
  %1365 = vmatpush2.msra.mxu0 0.0
  %1366 = vmatprep.subr.mxu0 0.0
  %1367 = vmatpush2.msra.mxu0 0.0
  %1368 = vmatprep.subr.mxu0 0.0
  %1369 = vmatpush2.msra.mxu0 0.0
  %1370 = vmatprep.subr.mxu0 0.0
  %1371 = vmatpush2.msra.mxu0 0.0
  %1372 = vmatprep.subr.mxu0 0.0
  %1373 = vmatpush2.msra.mxu0 0.0
  %1374 = vmatprep.subr.mxu0 0.0
  %1375 = vmatpush2.msra.mxu0 0.0
  %1376 = vmatprep.subr.mxu0 0.0
  %1377 = vmatpush2.msra.mxu0 0.0
  %1378 = vmatprep.subr.mxu0 0.0
  %1379 = vmatpush2.msra.mxu0 0.0
  %1380 = vmatprep.subr.mxu0 0.0
  %1381 = vmatpush2.msra.mxu0 0.0
  %1382 = vmatprep.subr.mxu0 0.0
  %1383 = vmatpush2.msra.mxu0 0.0
  %1384 = vmatprep.subr.mxu0 0.0
  %1385 = vmatpush2.msra.mxu0 0.0
  %1386 = vmatprep.subr.mxu0 0.0
  %1387 = vmatpush2.msra.mxu0 0.0
  %1388 = vmatprep.subr.mxu0 0.0
  %1389 = vmatpush2.msra.mxu0 0.0
  %1390 = vmatprep.mubr.f32.mxu0 0.0
  %1391 = vmatmul.mubr.f32.gmra.mxu0 %v1315
  %v1392 = vpop.f32.mrf.mxu0
  %v1393 = vadd.f32 %v1312, %v1392
  %v1394 = vpop.f32.mrf.mxu0
  %1395 = vmatprep.mubr.f32.mxu0 0.0
  %1396 = vmatmul.mubr.f32.gmra.mxu0 %v1318
  %v1397 = vpop.f32.mrf.mxu0
  %v1398 = vadd.f32 %v1312, %v1397
  %v1399 = vpop.f32.mrf.mxu0
  %1400 = vmatprep.mubr.f32.mxu0 0.0
  %1401 = vmatmul.mubr.f32.gmra.mxu0 %v1321
  %v1402 = vpop.f32.mrf.mxu0
  %v1403 = vadd.f32 %v1312, %v1402
  %v1404 = vpop.f32.mrf.mxu0
  %1405 = vmatprep.mubr.f32.mxu0 0.0
  %1406 = vmatmul.mubr.f32.gmra.mxu0 %v1324
  %v1407 = vpop.f32.mrf.mxu0
  %v1408 = vadd.f32 %v1312, %v1407
  %v1409 = vpop.f32.mrf.mxu0
  %1410 = vdwg.mxu0
  %s1411 = scalar_lea.vmem %s4, 32
  %v1412 = vld [vmem:[%s1411] sm:$0xff]
  %v1413 = vld [vmem:[%s1411 + $0x8] sm:$0xff]
  %v1414 = vld [vmem:[%s1411 + $0x10] sm:$0xff]
  %v1415 = vld [vmem:[%s1411 + $0x18] sm:$0xff]
  %v1416 = vmul.f32 %v1393, 0.25
  %v1417 = vmul.f32 %v1398, 0.25
  %v1418 = vmul.f32 %v1403, 0.25
  %v1419 = vmul.f32 %v1408, 0.25
  %1424 = vrot.lane.b32.xlu0 %v1393, 96
  %v1425 = vpop.permute.xlu0 %1424
  %1426 = vrot.lane.b32.xlu0 %v1398, 96
  %v1427 = vpop.permute.xlu0 %1426
  %1428 = vrot.lane.b32.xlu0 %v1403, 96
  %v1429 = vpop.permute.xlu0 %1428
  %1430 = vrot.lane.b32.xlu0 %v1408, 96
  %v1431 = vpop.permute.xlu0 %1430
  %v1433 = vsel %vm190, %v1416, 0
  %v1436 = vsel %vm190, %v1417, 0
  %v1439 = vsel %vm190, %v1418, 0
  %v1442 = vsel %vm190, %v1419, 0
  %v1444 = vsel %vm190, %v1425, 0
  %v1446 = vsel %vm190, %v1427, 0
  %v1448 = vsel %vm190, %v1429, 0
  %v1450 = vsel %vm190, %v1431, 0
  %1452 = vmatprep.subr.mxu0 0.0
  %1453 = vmatpush1.xpose.msra.mxu0 0.0
  %1454 = vmatprep.subr.mxu0 0.0
  %1455 = vmatpush1.xpose.msra.mxu0 0.0
  %1456 = vmatprep.subr.mxu0 0.0
  %1457 = vmatpush1.xpose.msra.mxu0 0.0
  %1458 = vmatprep.subr.mxu0 0.0
  %1459 = vmatpush1.xpose.msra.mxu0 0.0
  %1460 = vmatprep.subr.mxu0 0.0
  %1461 = vmatpush1.xpose.msra.mxu0 0.0
  %1462 = vmatprep.subr.mxu0 0.0
  %1463 = vmatpush1.xpose.msra.mxu0 0.0
  %1464 = vmatprep.subr.mxu0 0.0
  %1465 = vmatpush1.xpose.msra.mxu0 0.0
  %1466 = vmatprep.subr.mxu0 0.0
  %1467 = vmatpush1.xpose.msra.mxu0 0.0
  %1468 = vmatprep.subr.mxu0 0.0
  %1469 = vmatpush1.xpose.msra.mxu0 0.0
  %1470 = vmatprep.subr.mxu0 0.0
  %1471 = vmatpush1.xpose.msra.mxu0 0.0
  %1472 = vmatprep.subr.mxu0 0.0
  %1473 = vmatpush1.xpose.msra.mxu0 0.0
  %1474 = vmatprep.subr.mxu0 0.0
  %1475 = vmatpush1.xpose.msra.mxu0 0.0
  %1476 = vmatprep.subr.mxu0 0.0
  %1477 = vmatpush1.xpose.msra.mxu0 %v1450
  %1478 = vmatprep.subr.mxu0 0.0
  %1479 = vmatpush1.xpose.msra.mxu0 %v1448
  %1480 = vmatprep.subr.mxu0 0.0
  %1481 = vmatpush1.xpose.msra.mxu0 %v1446
  %1482 = vmatprep.subr.mxu0 0.0
  %1483 = vmatpush1.xpose.msra.mxu0 %v1444
  %1484 = vmatprep.subr.mxu0 0.0
  %1485 = vmatpush2.xpose.msra.mxu0 0.0
  %1486 = vmatprep.subr.mxu0 0.0
  %1487 = vmatpush2.xpose.msra.mxu0 0.0
  %1488 = vmatprep.subr.mxu0 0.0
  %1489 = vmatpush2.xpose.msra.mxu0 0.0
  %1490 = vmatprep.subr.mxu0 0.0
  %1491 = vmatpush2.xpose.msra.mxu0 0.0
  %1492 = vmatprep.subr.mxu0 0.0
  %1493 = vmatpush2.xpose.msra.mxu0 0.0
  %1494 = vmatprep.subr.mxu0 0.0
  %1495 = vmatpush2.xpose.msra.mxu0 0.0
  %1496 = vmatprep.subr.mxu0 0.0
  %1497 = vmatpush2.xpose.msra.mxu0 0.0
  %1498 = vmatprep.subr.mxu0 0.0
  %1499 = vmatpush2.xpose.msra.mxu0 0.0
  %1500 = vmatprep.subr.mxu0 0.0
  %1501 = vmatpush2.xpose.msra.mxu0 0.0
  %1502 = vmatprep.subr.mxu0 0.0
  %1503 = vmatpush2.xpose.msra.mxu0 0.0
  %1504 = vmatprep.subr.mxu0 0.0
  %1505 = vmatpush2.xpose.msra.mxu0 0.0
  %1506 = vmatprep.subr.mxu0 0.0
  %1507 = vmatpush2.xpose.msra.mxu0 0.0
  %1508 = vmatprep.subr.mxu0 0.0
  %1509 = vmatpush2.xpose.msra.mxu0 0.0
  %1510 = vmatprep.subr.mxu0 0.0
  %1511 = vmatpush2.xpose.msra.mxu0 0.0
  %1512 = vmatprep.subr.mxu0 0.0
  %1513 = vmatpush2.xpose.msra.mxu0 0.0
  %1514 = vmatprep.subr.mxu0 0.0
  %1515 = vmatpush2.xpose.msra.mxu0 0.0
  %1516 = vmatprep.mubr.f32.mxu0 0.0
  %1517 = vmatmul.mubr.f32.gmra.mxu0 %v1433
  %v1518 = vpop.f32.mrf.mxu0
  %v1519 = vadd.f32 %v57, %v1518
  %v1520 = vpop.f32.mrf.mxu0
  %1521 = vmatprep.mubr.f32.mxu0 0.0
  %1522 = vmatmul.mubr.f32.gmra.mxu0 %v1436
  %v1523 = vpop.f32.mrf.mxu0
  %v1524 = vadd.f32 %v58, %v1523
  %v1525 = vpop.f32.mrf.mxu0
  %1526 = vmatprep.mubr.f32.mxu0 0.0
  %1527 = vmatmul.mubr.f32.gmra.mxu0 %v1439
  %v1528 = vpop.f32.mrf.mxu0
  %v1529 = vadd.f32 %v59, %v1528
  %v1530 = vpop.f32.mrf.mxu0
  %1531 = vmatprep.mubr.f32.mxu0 0.0
  %1532 = vmatmul.mubr.f32.gmra.mxu0 %v1442
  %v1533 = vpop.f32.mrf.mxu0
  %v1534 = vadd.f32 %v60, %v1533
  %v1535 = vpop.f32.mrf.mxu0
  %1536 = vdwg.mxu0
  %v1537 = vsel %vm72, %v1519, -inf
  %1538 = vmax.xlane.f32.xlu0 %v1537
  %v1539 = vpop.xlane.xlu0 %1538
  %v1540 = vsel %vm72, %v1524, -inf
  %1541 = vmax.xlane.f32.xlu0 %v1540
  %v1542 = vpop.xlane.xlu0 %1541
  %v1543 = vsel %vm72, %v1529, -inf
  %1544 = vmax.xlane.f32.xlu0 %v1543
  %v1545 = vpop.xlane.xlu0 %1544
  %v1546 = vsel %vm72, %v1534, -inf
  %1547 = vmax.xlane.f32.xlu0 %v1546
  %v1548 = vpop.xlane.xlu0 %1547
  %v1549 = vsub.f32 %v1519, %v1539
  %v1550 = vsub.f32 %v1524, %v1542
  %v1551 = vsub.f32 %v1529, %v1545
  %v1552 = vsub.f32 %v1534, %v1548
  %v1553 = vmul.f32 %v1549, 1.442695
  %v1554 = vpow.pop %v1553
  %v1555 = vmul.f32 %v1550, 1.442695
  %v1556 = vpow.pop %v1555
  %v1557 = vmul.f32 %v1551, 1.442695
  %v1558 = vpow.pop %v1557
  %v1559 = vmul.f32 %v1552, 1.442695
  %v1560 = vpow.pop %v1559
  %v1561 = vsel %vm72, %v1554, 0.0
  %1562 = vadd.xlane.f32.xlu0 %v1561
  %v1563 = vpop.xlane.xlu0 %1562
  %v1564 = vsel %vm72, %v1556, 0.0
  %1565 = vadd.xlane.f32.xlu0 %v1564
  %v1566 = vpop.xlane.xlu0 %1565
  %v1567 = vsel %vm72, %v1558, 0.0
  %1568 = vadd.xlane.f32.xlu0 %v1567
  %v1569 = vpop.xlane.xlu0 %1568
  %v1570 = vsel %vm72, %v1560, 0.0
  %1571 = vadd.xlane.f32.xlu0 %v1570
  %v1572 = vpop.xlane.xlu0 %1571
  %v1573 = vrcp.pop %v1563
  %v1574 = vmul.f32 %v1554, %v1573
  %v1575 = vrcp.pop %v1566
  %v1576 = vmul.f32 %v1556, %v1575
  %v1577 = vrcp.pop %v1569
  %v1578 = vmul.f32 %v1558, %v1577
  %v1579 = vrcp.pop %v1572
  %v1580 = vmul.f32 %v1560, %v1579
  %1581 = vrot.lane.b32.xlu0 %v1393, 64
  %v1582 = vpop.permute.xlu0 %1581
  %1583 = vrot.lane.b32.xlu0 %v1398, 64
  %v1584 = vpop.permute.xlu0 %1583
  %1585 = vrot.lane.b32.xlu0 %v1403, 64
  %v1586 = vpop.permute.xlu0 %1585
  %1587 = vrot.lane.b32.xlu0 %v1408, 64
  %v1588 = vpop.permute.xlu0 %1587
  %v1594 = vsel %vm72, %v1574, 0
  %v1597 = vsel %vm72, %v1576, 0
  %v1600 = vsel %vm72, %v1578, 0
  %v1603 = vsel %vm72, %v1580, 0
  %1605 = vmatprep.subr.mxu0 0.0
  %1606 = vmatpush1.msra.mxu0 0.0
  %1607 = vmatprep.subr.mxu0 0.0
  %1608 = vmatpush1.msra.mxu0 0.0
  %1609 = vmatprep.subr.mxu0 0.0
  %1610 = vmatpush1.msra.mxu0 0.0
  %1611 = vmatprep.subr.mxu0 0.0
  %1612 = vmatpush1.msra.mxu0 0.0
  %1613 = vmatprep.subr.mxu0 0.0
  %1614 = vmatpush1.msra.mxu0 0.0
  %1615 = vmatprep.subr.mxu0 0.0
  %1616 = vmatpush1.msra.mxu0 0.0
  %1617 = vmatprep.subr.mxu0 0.0
  %1618 = vmatpush1.msra.mxu0 0.0
  %1619 = vmatprep.subr.mxu0 0.0
  %1620 = vmatpush1.msra.mxu0 0.0
  %1621 = vmatprep.subr.mxu0 0.0
  %1622 = vmatpush1.msra.mxu0 0.0
  %1623 = vmatprep.subr.mxu0 0.0
  %1624 = vmatpush1.msra.mxu0 0.0
  %1625 = vmatprep.subr.mxu0 0.0
  %1626 = vmatpush1.msra.mxu0 0.0
  %1627 = vmatprep.subr.mxu0 0.0
  %1628 = vmatpush1.msra.mxu0 0.0
  %1629 = vmatprep.subr.mxu0 0.0
  %1630 = vmatpush1.msra.mxu0 %v1588
  %1631 = vmatprep.subr.mxu0 0.0
  %1632 = vmatpush1.msra.mxu0 %v1586
  %1633 = vmatprep.subr.mxu0 0.0
  %1634 = vmatpush1.msra.mxu0 %v1584
  %1635 = vmatprep.subr.mxu0 0.0
  %1636 = vmatpush1.msra.mxu0 %v1582
  %1637 = vmatprep.subr.mxu0 0.0
  %1638 = vmatpush2.msra.mxu0 0.0
  %1639 = vmatprep.subr.mxu0 0.0
  %1640 = vmatpush2.msra.mxu0 0.0
  %1641 = vmatprep.subr.mxu0 0.0
  %1642 = vmatpush2.msra.mxu0 0.0
  %1643 = vmatprep.subr.mxu0 0.0
  %1644 = vmatpush2.msra.mxu0 0.0
  %1645 = vmatprep.subr.mxu0 0.0
  %1646 = vmatpush2.msra.mxu0 0.0
  %1647 = vmatprep.subr.mxu0 0.0
  %1648 = vmatpush2.msra.mxu0 0.0
  %1649 = vmatprep.subr.mxu0 0.0
  %1650 = vmatpush2.msra.mxu0 0.0
  %1651 = vmatprep.subr.mxu0 0.0
  %1652 = vmatpush2.msra.mxu0 0.0
  %1653 = vmatprep.subr.mxu0 0.0
  %1654 = vmatpush2.msra.mxu0 0.0
  %1655 = vmatprep.subr.mxu0 0.0
  %1656 = vmatpush2.msra.mxu0 0.0
  %1657 = vmatprep.subr.mxu0 0.0
  %1658 = vmatpush2.msra.mxu0 0.0
  %1659 = vmatprep.subr.mxu0 0.0
  %1660 = vmatpush2.msra.mxu0 0.0
  %1661 = vmatprep.subr.mxu0 0.0
  %1662 = vmatpush2.msra.mxu0 0.0
  %1663 = vmatprep.subr.mxu0 0.0
  %1664 = vmatpush2.msra.mxu0 0.0
  %1665 = vmatprep.subr.mxu0 0.0
  %1666 = vmatpush2.msra.mxu0 0.0
  %1667 = vmatprep.subr.mxu0 0.0
  %1668 = vmatpush2.msra.mxu0 0.0
  %1669 = vmatprep.mubr.f32.mxu0 0.0
  %1670 = vmatmul.mubr.f32.gmra.mxu0 %v1594
  %v1671 = vpop.f32.mrf.mxu0
  %v1672 = vadd.f32 0.0, %v1671
  %v1673 = vpop.f32.mrf.mxu0
  %1674 = vmatprep.mubr.f32.mxu0 0.0
  %1675 = vmatmul.mubr.f32.gmra.mxu0 %v1597
  %v1676 = vpop.f32.mrf.mxu0
  %v1677 = vadd.f32 0.0, %v1676
  %v1678 = vpop.f32.mrf.mxu0
  %1679 = vmatprep.mubr.f32.mxu0 0.0
  %1680 = vmatmul.mubr.f32.gmra.mxu0 %v1600
  %v1681 = vpop.f32.mrf.mxu0
  %v1682 = vadd.f32 0.0, %v1681
  %v1683 = vpop.f32.mrf.mxu0
  %1684 = vmatprep.mubr.f32.mxu0 0.0
  %1685 = vmatmul.mubr.f32.gmra.mxu0 %v1603
  %v1686 = vpop.f32.mrf.mxu0
  %v1687 = vadd.f32 0.0, %v1686
  %v1688 = vpop.f32.mrf.mxu0
  %1689 = vdwg.mxu0
  %1690 = vrot.lane.b32.xlu0 %v1416, 112
  %v1691 = vpop.permute.xlu0 %1690
  %1692 = vrot.lane.b32.xlu0 %v1417, 112
  %v1693 = vpop.permute.xlu0 %1692
  %1694 = vrot.lane.b32.xlu0 %v1418, 112
  %v1695 = vpop.permute.xlu0 %1694
  %1696 = vrot.lane.b32.xlu0 %v1419, 112
  %v1697 = vpop.permute.xlu0 %1696
  %1698 = vrot.lane.b32.xlu0 %v1393, 80
  %v1699 = vpop.permute.xlu0 %1698
  %1700 = vrot.lane.b32.xlu0 %v1398, 80
  %v1701 = vpop.permute.xlu0 %1700
  %1702 = vrot.lane.b32.xlu0 %v1403, 80
  %v1703 = vpop.permute.xlu0 %1702
  %1704 = vrot.lane.b32.xlu0 %v1408, 80
  %v1705 = vpop.permute.xlu0 %1704
  %v1706 = vsel %vm190, %v1691, 0
  %v1708 = vsel %vm190, %v1693, 0
  %v1710 = vsel %vm190, %v1695, 0
  %v1712 = vsel %vm190, %v1697, 0
  %v1714 = vsel %vm190, %v1699, 0
  %v1716 = vsel %vm190, %v1701, 0
  %v1718 = vsel %vm190, %v1703, 0
  %v1720 = vsel %vm190, %v1705, 0
  %1722 = vmatprep.subr.mxu0 0.0
  %1723 = vmatpush1.xpose.msra.mxu0 0.0
  %1724 = vmatprep.subr.mxu0 0.0
  %1725 = vmatpush1.xpose.msra.mxu0 0.0
  %1726 = vmatprep.subr.mxu0 0.0
  %1727 = vmatpush1.xpose.msra.mxu0 0.0
  %1728 = vmatprep.subr.mxu0 0.0
  %1729 = vmatpush1.xpose.msra.mxu0 0.0
  %1730 = vmatprep.subr.mxu0 0.0
  %1731 = vmatpush1.xpose.msra.mxu0 0.0
  %1732 = vmatprep.subr.mxu0 0.0
  %1733 = vmatpush1.xpose.msra.mxu0 0.0
  %1734 = vmatprep.subr.mxu0 0.0
  %1735 = vmatpush1.xpose.msra.mxu0 0.0
  %1736 = vmatprep.subr.mxu0 0.0
  %1737 = vmatpush1.xpose.msra.mxu0 0.0
  %1738 = vmatprep.subr.mxu0 0.0
  %1739 = vmatpush1.xpose.msra.mxu0 0.0
  %1740 = vmatprep.subr.mxu0 0.0
  %1741 = vmatpush1.xpose.msra.mxu0 0.0
  %1742 = vmatprep.subr.mxu0 0.0
  %1743 = vmatpush1.xpose.msra.mxu0 0.0
  %1744 = vmatprep.subr.mxu0 0.0
  %1745 = vmatpush1.xpose.msra.mxu0 0.0
  %1746 = vmatprep.subr.mxu0 0.0
  %1747 = vmatpush1.xpose.msra.mxu0 %v1720
  %1748 = vmatprep.subr.mxu0 0.0
  %1749 = vmatpush1.xpose.msra.mxu0 %v1718
  %1750 = vmatprep.subr.mxu0 0.0
  %1751 = vmatpush1.xpose.msra.mxu0 %v1716
  %1752 = vmatprep.subr.mxu0 0.0
  %1753 = vmatpush1.xpose.msra.mxu0 %v1714
  %1754 = vmatprep.subr.mxu0 0.0
  %1755 = vmatpush2.xpose.msra.mxu0 0.0
  %1756 = vmatprep.subr.mxu0 0.0
  %1757 = vmatpush2.xpose.msra.mxu0 0.0
  %1758 = vmatprep.subr.mxu0 0.0
  %1759 = vmatpush2.xpose.msra.mxu0 0.0
  %1760 = vmatprep.subr.mxu0 0.0
  %1761 = vmatpush2.xpose.msra.mxu0 0.0
  %1762 = vmatprep.subr.mxu0 0.0
  %1763 = vmatpush2.xpose.msra.mxu0 0.0
  %1764 = vmatprep.subr.mxu0 0.0
  %1765 = vmatpush2.xpose.msra.mxu0 0.0
  %1766 = vmatprep.subr.mxu0 0.0
  %1767 = vmatpush2.xpose.msra.mxu0 0.0
  %1768 = vmatprep.subr.mxu0 0.0
  %1769 = vmatpush2.xpose.msra.mxu0 0.0
  %1770 = vmatprep.subr.mxu0 0.0
  %1771 = vmatpush2.xpose.msra.mxu0 0.0
  %1772 = vmatprep.subr.mxu0 0.0
  %1773 = vmatpush2.xpose.msra.mxu0 0.0
  %1774 = vmatprep.subr.mxu0 0.0
  %1775 = vmatpush2.xpose.msra.mxu0 0.0
  %1776 = vmatprep.subr.mxu0 0.0
  %1777 = vmatpush2.xpose.msra.mxu0 0.0
  %1778 = vmatprep.subr.mxu0 0.0
  %1779 = vmatpush2.xpose.msra.mxu0 0.0
  %1780 = vmatprep.subr.mxu0 0.0
  %1781 = vmatpush2.xpose.msra.mxu0 0.0
  %1782 = vmatprep.subr.mxu0 0.0
  %1783 = vmatpush2.xpose.msra.mxu0 0.0
  %1784 = vmatprep.subr.mxu0 0.0
  %1785 = vmatpush2.xpose.msra.mxu0 0.0
  %1786 = vmatprep.mubr.f32.mxu0 0.0
  %1787 = vmatmul.mubr.f32.gmra.mxu0 %v1706
  %v1788 = vpop.f32.mrf.mxu0
  %v1789 = vadd.f32 %v57, %v1788
  %v1790 = vpop.f32.mrf.mxu0
  %1791 = vmatprep.mubr.f32.mxu0 0.0
  %1792 = vmatmul.mubr.f32.gmra.mxu0 %v1708
  %v1793 = vpop.f32.mrf.mxu0
  %v1794 = vadd.f32 %v58, %v1793
  %v1795 = vpop.f32.mrf.mxu0
  %1796 = vmatprep.mubr.f32.mxu0 0.0
  %1797 = vmatmul.mubr.f32.gmra.mxu0 %v1710
  %v1798 = vpop.f32.mrf.mxu0
  %v1799 = vadd.f32 %v59, %v1798
  %v1800 = vpop.f32.mrf.mxu0
  %1801 = vmatprep.mubr.f32.mxu0 0.0
  %1802 = vmatmul.mubr.f32.gmra.mxu0 %v1712
  %v1803 = vpop.f32.mrf.mxu0
  %v1804 = vadd.f32 %v60, %v1803
  %v1805 = vpop.f32.mrf.mxu0
  %1806 = vdwg.mxu0
  %v1807 = vsel %vm72, %v1789, -inf
  %1808 = vmax.xlane.f32.xlu0 %v1807
  %v1809 = vpop.xlane.xlu0 %1808
  %v1810 = vsel %vm72, %v1794, -inf
  %1811 = vmax.xlane.f32.xlu0 %v1810
  %v1812 = vpop.xlane.xlu0 %1811
  %v1813 = vsel %vm72, %v1799, -inf
  %1814 = vmax.xlane.f32.xlu0 %v1813
  %v1815 = vpop.xlane.xlu0 %1814
  %v1816 = vsel %vm72, %v1804, -inf
  %1817 = vmax.xlane.f32.xlu0 %v1816
  %v1818 = vpop.xlane.xlu0 %1817
  %v1819 = vsub.f32 %v1789, %v1809
  %v1820 = vsub.f32 %v1794, %v1812
  %v1821 = vsub.f32 %v1799, %v1815
  %v1822 = vsub.f32 %v1804, %v1818
  %v1823 = vmul.f32 %v1819, 1.442695
  %v1824 = vpow.pop %v1823
  %v1825 = vmul.f32 %v1820, 1.442695
  %v1826 = vpow.pop %v1825
  %v1827 = vmul.f32 %v1821, 1.442695
  %v1828 = vpow.pop %v1827
  %v1829 = vmul.f32 %v1822, 1.442695
  %v1830 = vpow.pop %v1829
  %v1831 = vsel %vm72, %v1824, 0.0
  %1832 = vadd.xlane.f32.xlu0 %v1831
  %v1833 = vpop.xlane.xlu0 %1832
  %v1834 = vsel %vm72, %v1826, 0.0
  %1835 = vadd.xlane.f32.xlu0 %v1834
  %v1836 = vpop.xlane.xlu0 %1835
  %v1837 = vsel %vm72, %v1828, 0.0
  %1838 = vadd.xlane.f32.xlu0 %v1837
  %v1839 = vpop.xlane.xlu0 %1838
  %v1840 = vsel %vm72, %v1830, 0.0
  %1841 = vadd.xlane.f32.xlu0 %v1840
  %v1842 = vpop.xlane.xlu0 %1841
  %v1843 = vrcp.pop %v1833
  %v1844 = vmul.f32 %v1824, %v1843
  %v1845 = vrcp.pop %v1836
  %v1846 = vmul.f32 %v1826, %v1845
  %v1847 = vrcp.pop %v1839
  %v1848 = vmul.f32 %v1828, %v1847
  %v1849 = vrcp.pop %v1842
  %v1850 = vmul.f32 %v1830, %v1849
  %1851 = vrot.lane.b32.xlu0 %v1393, 48
  %v1852 = vpop.permute.xlu0 %1851
  %1853 = vrot.lane.b32.xlu0 %v1398, 48
  %v1854 = vpop.permute.xlu0 %1853
  %1855 = vrot.lane.b32.xlu0 %v1403, 48
  %v1856 = vpop.permute.xlu0 %1855
  %1857 = vrot.lane.b32.xlu0 %v1408, 48
  %v1858 = vpop.permute.xlu0 %1857
  %v1864 = vsel %vm72, %v1844, 0
  %v1867 = vsel %vm72, %v1846, 0
  %v1870 = vsel %vm72, %v1848, 0
  %v1873 = vsel %vm72, %v1850, 0
  %1875 = vmatprep.subr.mxu0 0.0
  %1876 = vmatpush1.msra.mxu0 0.0
  %1877 = vmatprep.subr.mxu0 0.0
  %1878 = vmatpush1.msra.mxu0 0.0
  %1879 = vmatprep.subr.mxu0 0.0
  %1880 = vmatpush1.msra.mxu0 0.0
  %1881 = vmatprep.subr.mxu0 0.0
  %1882 = vmatpush1.msra.mxu0 0.0
  %1883 = vmatprep.subr.mxu0 0.0
  %1884 = vmatpush1.msra.mxu0 0.0
  %1885 = vmatprep.subr.mxu0 0.0
  %1886 = vmatpush1.msra.mxu0 0.0
  %1887 = vmatprep.subr.mxu0 0.0
  %1888 = vmatpush1.msra.mxu0 0.0
  %1889 = vmatprep.subr.mxu0 0.0
  %1890 = vmatpush1.msra.mxu0 0.0
  %1891 = vmatprep.subr.mxu0 0.0
  %1892 = vmatpush1.msra.mxu0 0.0
  %1893 = vmatprep.subr.mxu0 0.0
  %1894 = vmatpush1.msra.mxu0 0.0
  %1895 = vmatprep.subr.mxu0 0.0
  %1896 = vmatpush1.msra.mxu0 0.0
  %1897 = vmatprep.subr.mxu0 0.0
  %1898 = vmatpush1.msra.mxu0 0.0
  %1899 = vmatprep.subr.mxu0 0.0
  %1900 = vmatpush1.msra.mxu0 %v1858
  %1901 = vmatprep.subr.mxu0 0.0
  %1902 = vmatpush1.msra.mxu0 %v1856
  %1903 = vmatprep.subr.mxu0 0.0
  %1904 = vmatpush1.msra.mxu0 %v1854
  %1905 = vmatprep.subr.mxu0 0.0
  %1906 = vmatpush1.msra.mxu0 %v1852
  %1907 = vmatprep.subr.mxu0 0.0
  %1908 = vmatpush2.msra.mxu0 0.0
  %1909 = vmatprep.subr.mxu0 0.0
  %1910 = vmatpush2.msra.mxu0 0.0
  %1911 = vmatprep.subr.mxu0 0.0
  %1912 = vmatpush2.msra.mxu0 0.0
  %1913 = vmatprep.subr.mxu0 0.0
  %1914 = vmatpush2.msra.mxu0 0.0
  %1915 = vmatprep.subr.mxu0 0.0
  %1916 = vmatpush2.msra.mxu0 0.0
  %1917 = vmatprep.subr.mxu0 0.0
  %1918 = vmatpush2.msra.mxu0 0.0
  %1919 = vmatprep.subr.mxu0 0.0
  %1920 = vmatpush2.msra.mxu0 0.0
  %1921 = vmatprep.subr.mxu0 0.0
  %1922 = vmatpush2.msra.mxu0 0.0
  %1923 = vmatprep.subr.mxu0 0.0
  %1924 = vmatpush2.msra.mxu0 0.0
  %1925 = vmatprep.subr.mxu0 0.0
  %1926 = vmatpush2.msra.mxu0 0.0
  %1927 = vmatprep.subr.mxu0 0.0
  %1928 = vmatpush2.msra.mxu0 0.0
  %1929 = vmatprep.subr.mxu0 0.0
  %1930 = vmatpush2.msra.mxu0 0.0
  %1931 = vmatprep.subr.mxu0 0.0
  %1932 = vmatpush2.msra.mxu0 0.0
  %1933 = vmatprep.subr.mxu0 0.0
  %1934 = vmatpush2.msra.mxu0 0.0
  %1935 = vmatprep.subr.mxu0 0.0
  %1936 = vmatpush2.msra.mxu0 0.0
  %1937 = vmatprep.subr.mxu0 0.0
  %1938 = vmatpush2.msra.mxu0 0.0
  %1939 = vmatprep.mubr.f32.mxu0 0.0
  %1940 = vmatmul.mubr.f32.gmra.mxu0 %v1864
  %v1941 = vpop.f32.mrf.mxu0
  %v1942 = vadd.f32 0.0, %v1941
  %v1943 = vpop.f32.mrf.mxu0
  %1944 = vmatprep.mubr.f32.mxu0 0.0
  %1945 = vmatmul.mubr.f32.gmra.mxu0 %v1867
  %v1946 = vpop.f32.mrf.mxu0
  %v1947 = vadd.f32 0.0, %v1946
  %v1948 = vpop.f32.mrf.mxu0
  %1949 = vmatprep.mubr.f32.mxu0 0.0
  %1950 = vmatmul.mubr.f32.gmra.mxu0 %v1870
  %v1951 = vpop.f32.mrf.mxu0
  %v1952 = vadd.f32 0.0, %v1951
  %v1953 = vpop.f32.mrf.mxu0
  %1954 = vmatprep.mubr.f32.mxu0 0.0
  %1955 = vmatmul.mubr.f32.gmra.mxu0 %v1873
  %v1956 = vpop.f32.mrf.mxu0
  %v1957 = vadd.f32 0.0, %v1956
  %v1958 = vpop.f32.mrf.mxu0
  %1959 = vdwg.mxu0
  %v1961 = vsel %vm190, %v1942, 0
  %v1964 = vsel %vm190, %v1947, 0
  %v1967 = vsel %vm190, %v1952, 0
  %v1970 = vsel %vm190, %v1957, 0
  %1972 = vmatprep.subr.mxu0 0.0
  %1973 = vmatpush1.msra.mxu0 0.0
  %1974 = vmatprep.subr.mxu0 0.0
  %1975 = vmatpush1.msra.mxu0 0.0
  %1976 = vmatprep.subr.mxu0 0.0
  %1977 = vmatpush1.msra.mxu0 0.0
  %1978 = vmatprep.subr.mxu0 0.0
  %1979 = vmatpush1.msra.mxu0 0.0
  %1980 = vmatprep.subr.mxu0 0.0
  %1981 = vmatpush1.msra.mxu0 0.0
  %1982 = vmatprep.subr.mxu0 0.0
  %1983 = vmatpush1.msra.mxu0 0.0
  %1984 = vmatprep.subr.mxu0 0.0
  %1985 = vmatpush1.msra.mxu0 0.0
  %1986 = vmatprep.subr.mxu0 0.0
  %1987 = vmatpush1.msra.mxu0 0.0
  %1988 = vmatprep.subr.mxu0 0.0
  %1989 = vmatpush1.msra.mxu0 0.0
  %1990 = vmatprep.subr.mxu0 0.0
  %1991 = vmatpush1.msra.mxu0 0.0
  %1992 = vmatprep.subr.mxu0 0.0
  %1993 = vmatpush1.msra.mxu0 0.0
  %1994 = vmatprep.subr.mxu0 0.0
  %1995 = vmatpush1.msra.mxu0 0.0
  %1996 = vmatprep.subr.mxu0 0.0
  %1997 = vmatpush1.msra.mxu0 0.0
  %1998 = vmatprep.subr.mxu0 0.0
  %1999 = vmatpush1.msra.mxu0 0.0
  %2000 = vmatprep.subr.mxu0 0.0
  %2001 = vmatpush1.msra.mxu0 %v1415
  %2002 = vmatprep.subr.mxu0 0.0
  %2003 = vmatpush1.msra.mxu0 %v1414
  %2004 = vmatprep.subr.mxu0 0.0
  %2005 = vmatpush2.msra.mxu0 0.0
  %2006 = vmatprep.subr.mxu0 0.0
  %2007 = vmatpush2.msra.mxu0 0.0
  %2008 = vmatprep.subr.mxu0 0.0
  %2009 = vmatpush2.msra.mxu0 0.0
  %2010 = vmatprep.subr.mxu0 0.0
  %2011 = vmatpush2.msra.mxu0 0.0
  %2012 = vmatprep.subr.mxu0 0.0
  %2013 = vmatpush2.msra.mxu0 0.0
  %2014 = vmatprep.subr.mxu0 0.0
  %2015 = vmatpush2.msra.mxu0 0.0
  %2016 = vmatprep.subr.mxu0 0.0
  %2017 = vmatpush2.msra.mxu0 0.0
  %2018 = vmatprep.subr.mxu0 0.0
  %2019 = vmatpush2.msra.mxu0 0.0
  %2020 = vmatprep.subr.mxu0 0.0
  %2021 = vmatpush2.msra.mxu0 0.0
  %2022 = vmatprep.subr.mxu0 0.0
  %2023 = vmatpush2.msra.mxu0 0.0
  %2024 = vmatprep.subr.mxu0 0.0
  %2025 = vmatpush2.msra.mxu0 0.0
  %2026 = vmatprep.subr.mxu0 0.0
  %2027 = vmatpush2.msra.mxu0 0.0
  %2028 = vmatprep.subr.mxu0 0.0
  %2029 = vmatpush2.msra.mxu0 0.0
  %2030 = vmatprep.subr.mxu0 0.0
  %2031 = vmatpush2.msra.mxu0 0.0
  %2032 = vmatprep.subr.mxu0 0.0
  %2033 = vmatpush2.msra.mxu0 0.0
  %2034 = vmatprep.subr.mxu0 0.0
  %2035 = vmatpush2.msra.mxu0 0.0
  %2036 = vmatprep.mubr.f32.mxu0 0.0
  %2037 = vmatmul.mubr.f32.gmra.mxu0 %v1961
  %v2038 = vpop.f32.mrf.mxu0
  %v2039 = vadd.f32 0.0, %v2038
  %v2040 = vpop.f32.mrf.mxu0
  %2041 = vmatprep.mubr.f32.mxu0 0.0
  %2042 = vmatmul.mubr.f32.gmra.mxu0 %v1964
  %v2043 = vpop.f32.mrf.mxu0
  %v2044 = vadd.f32 0.0, %v2043
  %v2045 = vpop.f32.mrf.mxu0
  %2046 = vmatprep.mubr.f32.mxu0 0.0
  %2047 = vmatmul.mubr.f32.gmra.mxu0 %v1967
  %v2048 = vpop.f32.mrf.mxu0
  %v2049 = vadd.f32 0.0, %v2048
  %v2050 = vpop.f32.mrf.mxu0
  %2051 = vmatprep.mubr.f32.mxu0 0.0
  %2052 = vmatmul.mubr.f32.gmra.mxu0 %v1970
  %v2053 = vpop.f32.mrf.mxu0
  %v2054 = vadd.f32 0.0, %v2053
  %v2055 = vpop.f32.mrf.mxu0
  %2056 = vdwg.mxu0
  %v2058 = vsel %vm190, %v1672, 0
  %v2061 = vsel %vm190, %v1677, 0
  %v2064 = vsel %vm190, %v1682, 0
  %v2067 = vsel %vm190, %v1687, 0
  %2069 = vmatprep.subr.mxu0 0.0
  %2070 = vmatpush1.msra.mxu0 0.0
  %2071 = vmatprep.subr.mxu0 0.0
  %2072 = vmatpush1.msra.mxu0 0.0
  %2073 = vmatprep.subr.mxu0 0.0
  %2074 = vmatpush1.msra.mxu0 0.0
  %2075 = vmatprep.subr.mxu0 0.0
  %2076 = vmatpush1.msra.mxu0 0.0
  %2077 = vmatprep.subr.mxu0 0.0
  %2078 = vmatpush1.msra.mxu0 0.0
  %2079 = vmatprep.subr.mxu0 0.0
  %2080 = vmatpush1.msra.mxu0 0.0
  %2081 = vmatprep.subr.mxu0 0.0
  %2082 = vmatpush1.msra.mxu0 0.0
  %2083 = vmatprep.subr.mxu0 0.0
  %2084 = vmatpush1.msra.mxu0 0.0
  %2085 = vmatprep.subr.mxu0 0.0
  %2086 = vmatpush1.msra.mxu0 0.0
  %2087 = vmatprep.subr.mxu0 0.0
  %2088 = vmatpush1.msra.mxu0 0.0
  %2089 = vmatprep.subr.mxu0 0.0
  %2090 = vmatpush1.msra.mxu0 0.0
  %2091 = vmatprep.subr.mxu0 0.0
  %2092 = vmatpush1.msra.mxu0 0.0
  %2093 = vmatprep.subr.mxu0 0.0
  %2094 = vmatpush1.msra.mxu0 0.0
  %2095 = vmatprep.subr.mxu0 0.0
  %2096 = vmatpush1.msra.mxu0 0.0
  %2097 = vmatprep.subr.mxu0 0.0
  %2098 = vmatpush1.msra.mxu0 %v1413
  %2099 = vmatprep.subr.mxu0 0.0
  %2100 = vmatpush1.msra.mxu0 %v1412
  %2101 = vmatprep.subr.mxu0 0.0
  %2102 = vmatpush2.msra.mxu0 0.0
  %2103 = vmatprep.subr.mxu0 0.0
  %2104 = vmatpush2.msra.mxu0 0.0
  %2105 = vmatprep.subr.mxu0 0.0
  %2106 = vmatpush2.msra.mxu0 0.0
  %2107 = vmatprep.subr.mxu0 0.0
  %2108 = vmatpush2.msra.mxu0 0.0
  %2109 = vmatprep.subr.mxu0 0.0
  %2110 = vmatpush2.msra.mxu0 0.0
  %2111 = vmatprep.subr.mxu0 0.0
  %2112 = vmatpush2.msra.mxu0 0.0
  %2113 = vmatprep.subr.mxu0 0.0
  %2114 = vmatpush2.msra.mxu0 0.0
  %2115 = vmatprep.subr.mxu0 0.0
  %2116 = vmatpush2.msra.mxu0 0.0
  %2117 = vmatprep.subr.mxu0 0.0
  %2118 = vmatpush2.msra.mxu0 0.0
  %2119 = vmatprep.subr.mxu0 0.0
  %2120 = vmatpush2.msra.mxu0 0.0
  %2121 = vmatprep.subr.mxu0 0.0
  %2122 = vmatpush2.msra.mxu0 0.0
  %2123 = vmatprep.subr.mxu0 0.0
  %2124 = vmatpush2.msra.mxu0 0.0
  %2125 = vmatprep.subr.mxu0 0.0
  %2126 = vmatpush2.msra.mxu0 0.0
  %2127 = vmatprep.subr.mxu0 0.0
  %2128 = vmatpush2.msra.mxu0 0.0
  %2129 = vmatprep.subr.mxu0 0.0
  %2130 = vmatpush2.msra.mxu0 0.0
  %2131 = vmatprep.subr.mxu0 0.0
  %2132 = vmatpush2.msra.mxu0 0.0
  %2133 = vmatprep.mubr.f32.mxu0 0.0
  %2134 = vmatmul.mubr.f32.gmra.mxu0 %v2058
  %v2135 = vpop.f32.mrf.mxu0
  %v2136 = vadd.f32 %v2039, %v2135
  %v2137 = vpop.f32.mrf.mxu0
  %2138 = vmatprep.mubr.f32.mxu0 0.0
  %2139 = vmatmul.mubr.f32.gmra.mxu0 %v2061
  %v2140 = vpop.f32.mrf.mxu0
  %v2141 = vadd.f32 %v2044, %v2140
  %v2142 = vpop.f32.mrf.mxu0
  %2143 = vmatprep.mubr.f32.mxu0 0.0
  %2144 = vmatmul.mubr.f32.gmra.mxu0 %v2064
  %v2145 = vpop.f32.mrf.mxu0
  %v2146 = vadd.f32 %v2049, %v2145
  %v2147 = vpop.f32.mrf.mxu0
  %2148 = vmatprep.mubr.f32.mxu0 0.0
  %2149 = vmatmul.mubr.f32.gmra.mxu0 %v2067
  %v2150 = vpop.f32.mrf.mxu0
  %v2151 = vadd.f32 %v2054, %v2150
  %v2152 = vpop.f32.mrf.mxu0
  %2153 = vdwg.mxu0
  %s2154 = scalar_lea.vmem %s5, 1
  %v2155 = vld [vmem:[%s2154] sm:$0x1]
  %v2157 = vlaneseq
  %v2158 = vshrl.u32 %v2157, 7
  %v2159 = vsub.s32 0, %v2158
  %v2160 = vrot.slane %v2155, %v2159
  %v2162 = vadd.f32 %v2136, %v2160
  %v2163 = vadd.f32 %v2141, %v2160
  %v2164 = vadd.f32 %v2146, %v2160
  %v2165 = vadd.f32 %v2151, %v2160
  %v2166 = vadd.f32 %v1297, %v2162
  %v2167 = vadd.f32 %v1298, %v2163
  %v2168 = vadd.f32 %v1299, %v2164
  %v2169 = vadd.f32 %v1300, %v2165
  %s2170 = scalar_lea.vmem %s6, 1
  %v2171 = vld [vmem:[%s2170] sm:$0x1]
  %s2172 = scalar_lea.vmem %s7, 1
  %v2173 = vld [vmem:[%s2172] sm:$0x1]
  %v2174 = vsel %vm72, %v2166, 0.0
  %2175 = vadd.xlane.f32.xlu0 %v2174
  %v2176 = vpop.xlane.xlu0 %2175
  %v2177 = vsel %vm72, %v2167, 0.0
  %2178 = vadd.xlane.f32.xlu0 %v2177
  %v2179 = vpop.xlane.xlu0 %2178
  %v2180 = vsel %vm72, %v2168, 0.0
  %2181 = vadd.xlane.f32.xlu0 %v2180
  %v2182 = vpop.xlane.xlu0 %2181
  %v2183 = vsel %vm72, %v2169, 0.0
  %2184 = vadd.xlane.f32.xlu0 %v2183
  %v2185 = vpop.xlane.xlu0 %2184
  %v2186 = vmul.f32 %v2176, %v942
  %v2187 = vmul.f32 %v2179, %v942
  %v2188 = vmul.f32 %v2182, %v942
  %v2189 = vmul.f32 %v2185, %v942
  %v2190 = vsub.f32 %v2166, %v2186
  %v2191 = vsub.f32 %v2167, %v2187
  %v2192 = vsub.f32 %v2168, %v2188
  %v2193 = vsub.f32 %v2169, %v2189
  %v2194 = vmul.f32 %v2190, %v2190
  %v2195 = vmul.f32 %v2191, %v2191
  %v2196 = vmul.f32 %v2192, %v2192
  %v2197 = vmul.f32 %v2193, %v2193
  %v2198 = vsel %vm72, %v2194, 0.0
  %2199 = vadd.xlane.f32.xlu0 %v2198
  %v2200 = vpop.xlane.xlu0 %2199
  %v2201 = vsel %vm72, %v2195, 0.0
  %2202 = vadd.xlane.f32.xlu0 %v2201
  %v2203 = vpop.xlane.xlu0 %2202
  %v2204 = vsel %vm72, %v2196, 0.0
  %2205 = vadd.xlane.f32.xlu0 %v2204
  %v2206 = vpop.xlane.xlu0 %2205
  %v2207 = vsel %vm72, %v2197, 0.0
  %2208 = vadd.xlane.f32.xlu0 %v2207
  %v2209 = vpop.xlane.xlu0 %2208
  %v2210 = vmul.f32 %v2200, %v942
  %v2211 = vmul.f32 %v2203, %v942
  %v2212 = vmul.f32 %v2206, %v942
  %v2213 = vmul.f32 %v2209, %v942
  %v2214 = vadd.f32 %v2210, 1e-05
  %v2215 = vadd.f32 %v2211, 1e-05
  %v2216 = vadd.f32 %v2212, 1e-05
  %v2217 = vadd.f32 %v2213, 1e-05
  %v2218 = vrsqrt.pop %v2214
  %v2219 = vrsqrt.pop %v2215
  %v2220 = vrsqrt.pop %v2216
  %v2221 = vrsqrt.pop %v2217
  %v2222 = vmul.f32 %v2190, %v2218
  %v2223 = vmul.f32 %v2191, %v2219
  %v2224 = vmul.f32 %v2192, %v2220
  %v2225 = vmul.f32 %v2193, %v2221
  %v2227 = vlaneseq
  %v2228 = vshrl.u32 %v2227, 7
  %v2229 = vsub.s32 0, %v2228
  %v2230 = vrot.slane %v2171, %v2229
  %v2232 = vmul.f32 %v2222, %v2230
  %v2233 = vmul.f32 %v2223, %v2230
  %v2234 = vmul.f32 %v2224, %v2230
  %v2235 = vmul.f32 %v2225, %v2230
  %v2237 = vlaneseq
  %v2238 = vshrl.u32 %v2237, 7
  %v2239 = vsub.s32 0, %v2238
  %v2240 = vrot.slane %v2173, %v2239
  %v2242 = vadd.f32 %v2232, %v2240
  %v2243 = vadd.f32 %v2233, %v2240
  %v2244 = vadd.f32 %v2234, %v2240
  %v2245 = vadd.f32 %v2235, %v2240
  %s2246 = scalar_lea.vmem %s8, 32
  %v2247 = vld [vmem:[%s2246] sm:$0xff]
  %v2248 = vld [vmem:[%s2246 + $0x8] sm:$0xff]
  %v2249 = vld [vmem:[%s2246 + $0x10] sm:$0xff]
  %v2250 = vld [vmem:[%s2246 + $0x18] sm:$0xff]
  %s2251 = scalar_lea.vmem %s9, 1
  %v2252 = vld [vmem:[%s2251] sm:$0x1]
  %v2254 = vlaneseq
  %v2255 = vshrl.u32 %v2254, 7
  %v2256 = vsub.s32 0, %v2255
  %v2257 = vrot.slane %v2252, %v2256
  %v2260 = vsel %vm72, %v2242, 0
  %v2263 = vsel %vm72, %v2243, 0
  %v2266 = vsel %vm72, %v2244, 0
  %v2269 = vsel %vm72, %v2245, 0
  %2271 = vmatprep.subr.mxu0 0.0
  %2272 = vmatpush1.msra.mxu0 0.0
  %2273 = vmatprep.subr.mxu0 0.0
  %2274 = vmatpush1.msra.mxu0 0.0
  %2275 = vmatprep.subr.mxu0 0.0
  %2276 = vmatpush1.msra.mxu0 0.0
  %2277 = vmatprep.subr.mxu0 0.0
  %2278 = vmatpush1.msra.mxu0 0.0
  %2279 = vmatprep.subr.mxu0 0.0
  %2280 = vmatpush1.msra.mxu0 0.0
  %2281 = vmatprep.subr.mxu0 0.0
  %2282 = vmatpush1.msra.mxu0 0.0
  %2283 = vmatprep.subr.mxu0 0.0
  %2284 = vmatpush1.msra.mxu0 0.0
  %2285 = vmatprep.subr.mxu0 0.0
  %2286 = vmatpush1.msra.mxu0 0.0
  %2287 = vmatprep.subr.mxu0 0.0
  %2288 = vmatpush1.msra.mxu0 0.0
  %2289 = vmatprep.subr.mxu0 0.0
  %2290 = vmatpush1.msra.mxu0 0.0
  %2291 = vmatprep.subr.mxu0 0.0
  %2292 = vmatpush1.msra.mxu0 0.0
  %2293 = vmatprep.subr.mxu0 0.0
  %2294 = vmatpush1.msra.mxu0 0.0
  %2295 = vmatprep.subr.mxu0 0.0
  %2296 = vmatpush1.msra.mxu0 %v2250
  %2297 = vmatprep.subr.mxu0 0.0
  %2298 = vmatpush1.msra.mxu0 %v2249
  %2299 = vmatprep.subr.mxu0 0.0
  %2300 = vmatpush1.msra.mxu0 %v2248
  %2301 = vmatprep.subr.mxu0 0.0
  %2302 = vmatpush1.msra.mxu0 %v2247
  %2303 = vmatprep.subr.mxu0 0.0
  %2304 = vmatpush2.msra.mxu0 0.0
  %2305 = vmatprep.subr.mxu0 0.0
  %2306 = vmatpush2.msra.mxu0 0.0
  %2307 = vmatprep.subr.mxu0 0.0
  %2308 = vmatpush2.msra.mxu0 0.0
  %2309 = vmatprep.subr.mxu0 0.0
  %2310 = vmatpush2.msra.mxu0 0.0
  %2311 = vmatprep.subr.mxu0 0.0
  %2312 = vmatpush2.msra.mxu0 0.0
  %2313 = vmatprep.subr.mxu0 0.0
  %2314 = vmatpush2.msra.mxu0 0.0
  %2315 = vmatprep.subr.mxu0 0.0
  %2316 = vmatpush2.msra.mxu0 0.0
  %2317 = vmatprep.subr.mxu0 0.0
  %2318 = vmatpush2.msra.mxu0 0.0
  %2319 = vmatprep.subr.mxu0 0.0
  %2320 = vmatpush2.msra.mxu0 0.0
  %2321 = vmatprep.subr.mxu0 0.0
  %2322 = vmatpush2.msra.mxu0 0.0
  %2323 = vmatprep.subr.mxu0 0.0
  %2324 = vmatpush2.msra.mxu0 0.0
  %2325 = vmatprep.subr.mxu0 0.0
  %2326 = vmatpush2.msra.mxu0 0.0
  %2327 = vmatprep.subr.mxu0 0.0
  %2328 = vmatpush2.msra.mxu0 0.0
  %2329 = vmatprep.subr.mxu0 0.0
  %2330 = vmatpush2.msra.mxu0 0.0
  %2331 = vmatprep.subr.mxu0 0.0
  %2332 = vmatpush2.msra.mxu0 0.0
  %2333 = vmatprep.subr.mxu0 0.0
  %2334 = vmatpush2.msra.mxu0 0.0
  %2335 = vmatprep.mubr.f32.mxu0 0.0
  %2336 = vmatmul.mubr.f32.gmra.mxu0 %v2260
  %v2337 = vpop.f32.mrf.mxu0
  %v2338 = vadd.f32 %v2257, %v2337
  %v2339 = vpop.f32.mrf.mxu0
  %2340 = vmatprep.mubr.f32.mxu0 0.0
  %2341 = vmatmul.mubr.f32.gmra.mxu0 %v2263
  %v2342 = vpop.f32.mrf.mxu0
  %v2343 = vadd.f32 %v2257, %v2342
  %v2344 = vpop.f32.mrf.mxu0
  %2345 = vmatprep.mubr.f32.mxu0 0.0
  %2346 = vmatmul.mubr.f32.gmra.mxu0 %v2266
  %v2347 = vpop.f32.mrf.mxu0
  %v2348 = vadd.f32 %v2257, %v2347
  %v2349 = vpop.f32.mrf.mxu0
  %2350 = vmatprep.mubr.f32.mxu0 0.0
  %2351 = vmatmul.mubr.f32.gmra.mxu0 %v2269
  %v2352 = vpop.f32.mrf.mxu0
  %v2353 = vadd.f32 %v2257, %v2352
  %v2354 = vpop.f32.mrf.mxu0
  %2355 = vdwg.mxu0
  %v2356 = vmax.f32 %v2338, 0.0
  %v2357 = vmax.f32 %v2343, 0.0
  %v2358 = vmax.f32 %v2348, 0.0
  %v2359 = vmax.f32 %v2353, 0.0
  %s2360 = scalar_lea.vmem %s10, 128
  %v2361 = vld [vmem:[%s2360] sm:$0xff]
  %v2362 = vld [vmem:[%s2360 + $0x8] sm:$0xff]
  %v2363 = vld [vmem:[%s2360 + $0x10] sm:$0xff]
  %v2364 = vld [vmem:[%s2360 + $0x18] sm:$0xff]
  %v2365 = vld [vmem:[%s2360 + $0x20] sm:$0xff]
  %v2366 = vld [vmem:[%s2360 + $0x28] sm:$0xff]
  %v2367 = vld [vmem:[%s2360 + $0x30] sm:$0xff]
  %v2368 = vld [vmem:[%s2360 + $0x38] sm:$0xff]
  %v2369 = vld [vmem:[%s2360 + $0x40] sm:$0xff]
  %v2370 = vld [vmem:[%s2360 + $0x48] sm:$0xff]
  %v2371 = vld [vmem:[%s2360 + $0x50] sm:$0xff]
  %v2372 = vld [vmem:[%s2360 + $0x58] sm:$0xff]
  %v2373 = vld [vmem:[%s2360 + $0x60] sm:$0xff]
  %v2374 = vld [vmem:[%s2360 + $0x68] sm:$0xff]
  %v2375 = vld [vmem:[%s2360 + $0x70] sm:$0xff]
  %v2376 = vld [vmem:[%s2360 + $0x78] sm:$0xff]
  %s2377 = scalar_lea.vmem %s11, 1
  %v2378 = vld [vmem:[%s2377] sm:$0x1]
  %v2380 = vlaneseq
  %v2381 = vshrl.u32 %v2380, 7
  %v2382 = vsub.s32 0, %v2381
  %v2383 = vrot.slane %v2378, %v2382
  %2385 = vmatprep.subr.mxu0 0.0
  %2386 = vmatpush1.msra.mxu0 %v2376
  %2387 = vmatprep.subr.mxu0 0.0
  %2388 = vmatpush1.msra.mxu0 %v2375
  %2389 = vmatprep.subr.mxu0 0.0
  %2390 = vmatpush1.msra.mxu0 %v2374
  %2391 = vmatprep.subr.mxu0 0.0
  %2392 = vmatpush1.msra.mxu0 %v2373
  %2393 = vmatprep.subr.mxu0 0.0
  %2394 = vmatpush1.msra.mxu0 %v2372
  %2395 = vmatprep.subr.mxu0 0.0
  %2396 = vmatpush1.msra.mxu0 %v2371
  %2397 = vmatprep.subr.mxu0 0.0
  %2398 = vmatpush1.msra.mxu0 %v2370
  %2399 = vmatprep.subr.mxu0 0.0
  %2400 = vmatpush1.msra.mxu0 %v2369
  %2401 = vmatprep.subr.mxu0 0.0
  %2402 = vmatpush1.msra.mxu0 %v2368
  %2403 = vmatprep.subr.mxu0 0.0
  %2404 = vmatpush1.msra.mxu0 %v2367
  %2405 = vmatprep.subr.mxu0 0.0
  %2406 = vmatpush1.msra.mxu0 %v2366
  %2407 = vmatprep.subr.mxu0 0.0
  %2408 = vmatpush1.msra.mxu0 %v2365
  %2409 = vmatprep.subr.mxu0 0.0
  %2410 = vmatpush1.msra.mxu0 %v2364
  %2411 = vmatprep.subr.mxu0 0.0
  %2412 = vmatpush1.msra.mxu0 %v2363
  %2413 = vmatprep.subr.mxu0 0.0
  %2414 = vmatpush1.msra.mxu0 %v2362
  %2415 = vmatprep.subr.mxu0 0.0
  %2416 = vmatpush1.msra.mxu0 %v2361
  %2417 = vmatprep.subr.mxu0 0.0
  %2418 = vmatpush2.msra.mxu0 0.0
  %2419 = vmatprep.subr.mxu0 0.0
  %2420 = vmatpush2.msra.mxu0 0.0
  %2421 = vmatprep.subr.mxu0 0.0
  %2422 = vmatpush2.msra.mxu0 0.0
  %2423 = vmatprep.subr.mxu0 0.0
  %2424 = vmatpush2.msra.mxu0 0.0
  %2425 = vmatprep.subr.mxu0 0.0
  %2426 = vmatpush2.msra.mxu0 0.0
  %2427 = vmatprep.subr.mxu0 0.0
  %2428 = vmatpush2.msra.mxu0 0.0
  %2429 = vmatprep.subr.mxu0 0.0
  %2430 = vmatpush2.msra.mxu0 0.0
  %2431 = vmatprep.subr.mxu0 0.0
  %2432 = vmatpush2.msra.mxu0 0.0
  %2433 = vmatprep.subr.mxu0 0.0
  %2434 = vmatpush2.msra.mxu0 0.0
  %2435 = vmatprep.subr.mxu0 0.0
  %2436 = vmatpush2.msra.mxu0 0.0
  %2437 = vmatprep.subr.mxu0 0.0
  %2438 = vmatpush2.msra.mxu0 0.0
  %2439 = vmatprep.subr.mxu0 0.0
  %2440 = vmatpush2.msra.mxu0 0.0
  %2441 = vmatprep.subr.mxu0 0.0
  %2442 = vmatpush2.msra.mxu0 0.0
  %2443 = vmatprep.subr.mxu0 0.0
  %2444 = vmatpush2.msra.mxu0 0.0
  %2445 = vmatprep.subr.mxu0 0.0
  %2446 = vmatpush2.msra.mxu0 0.0
  %2447 = vmatprep.subr.mxu0 0.0
  %2448 = vmatpush2.msra.mxu0 0.0
  %2449 = vmatprep.mubr.f32.mxu0 0.0
  %2450 = vmatmul.mubr.f32.gmra.mxu0 %v2356
  %v2451 = vpop.f32.mrf.mxu0
  %v2452 = vadd.f32 %v2383, %v2451
  %v2453 = vpop.f32.mrf.mxu0
  %2454 = vmatprep.mubr.f32.mxu0 0.0
  %2455 = vmatmul.mubr.f32.gmra.mxu0 %v2357
  %v2456 = vpop.f32.mrf.mxu0
  %v2457 = vadd.f32 %v2383, %v2456
  %v2458 = vpop.f32.mrf.mxu0
  %2459 = vmatprep.mubr.f32.mxu0 0.0
  %2460 = vmatmul.mubr.f32.gmra.mxu0 %v2358
  %v2461 = vpop.f32.mrf.mxu0
  %v2462 = vadd.f32 %v2383, %v2461
  %v2463 = vpop.f32.mrf.mxu0
  %2464 = vmatprep.mubr.f32.mxu0 0.0
  %2465 = vmatmul.mubr.f32.gmra.mxu0 %v2359
  %v2466 = vpop.f32.mrf.mxu0
  %v2467 = vadd.f32 %v2383, %v2466
  %v2468 = vpop.f32.mrf.mxu0
  %2469 = vdwg.mxu0
  %v2470 = vadd.f32 %v2242, %v2452
  %v2471 = vadd.f32 %v2243, %v2457
  %v2472 = vadd.f32 %v2244, %v2462
  %v2473 = vadd.f32 %v2245, %v2467
  %s2474 = scalar_lea.vmem %s12, 1
  %v2475 = vld [vmem:[%s2474] sm:$0x1]
  %s2476 = scalar_lea.vmem %s13, 1
  %v2477 = vld [vmem:[%s2476] sm:$0x1]
  %v2478 = vsel %vm72, %v2470, 0.0
  %2479 = vadd.xlane.f32.xlu0 %v2478
  %v2480 = vpop.xlane.xlu0 %2479
  %v2481 = vsel %vm72, %v2471, 0.0
  %2482 = vadd.xlane.f32.xlu0 %v2481
  %v2483 = vpop.xlane.xlu0 %2482
  %v2484 = vsel %vm72, %v2472, 0.0
  %2485 = vadd.xlane.f32.xlu0 %v2484
  %v2486 = vpop.xlane.xlu0 %2485
  %v2487 = vsel %vm72, %v2473, 0.0
  %2488 = vadd.xlane.f32.xlu0 %v2487
  %v2489 = vpop.xlane.xlu0 %2488
  %v2490 = vmul.f32 %v2480, %v942
  %v2491 = vmul.f32 %v2483, %v942
  %v2492 = vmul.f32 %v2486, %v942
  %v2493 = vmul.f32 %v2489, %v942
  %v2494 = vsub.f32 %v2470, %v2490
  %v2495 = vsub.f32 %v2471, %v2491
  %v2496 = vsub.f32 %v2472, %v2492
  %v2497 = vsub.f32 %v2473, %v2493
  %v2498 = vmul.f32 %v2494, %v2494
  %v2499 = vmul.f32 %v2495, %v2495
  %v2500 = vmul.f32 %v2496, %v2496
  %v2501 = vmul.f32 %v2497, %v2497
  %v2502 = vsel %vm72, %v2498, 0.0
  %2503 = vadd.xlane.f32.xlu0 %v2502
  %v2504 = vpop.xlane.xlu0 %2503
  %v2505 = vsel %vm72, %v2499, 0.0
  %2506 = vadd.xlane.f32.xlu0 %v2505
  %v2507 = vpop.xlane.xlu0 %2506
  %v2508 = vsel %vm72, %v2500, 0.0
  %2509 = vadd.xlane.f32.xlu0 %v2508
  %v2510 = vpop.xlane.xlu0 %2509
  %v2511 = vsel %vm72, %v2501, 0.0
  %2512 = vadd.xlane.f32.xlu0 %v2511
  %v2513 = vpop.xlane.xlu0 %2512
  %v2514 = vmul.f32 %v2504, %v942
  %v2515 = vmul.f32 %v2507, %v942
  %v2516 = vmul.f32 %v2510, %v942
  %v2517 = vmul.f32 %v2513, %v942
  %v2518 = vadd.f32 %v2514, 1e-05
  %v2519 = vadd.f32 %v2515, 1e-05
  %v2520 = vadd.f32 %v2516, 1e-05
  %v2521 = vadd.f32 %v2517, 1e-05
  %v2522 = vrsqrt.pop %v2518
  %v2523 = vrsqrt.pop %v2519
  %v2524 = vrsqrt.pop %v2520
  %v2525 = vrsqrt.pop %v2521
  %v2526 = vmul.f32 %v2494, %v2522
  %v2527 = vmul.f32 %v2495, %v2523
  %v2528 = vmul.f32 %v2496, %v2524
  %v2529 = vmul.f32 %v2497, %v2525
  %v2531 = vlaneseq
  %v2532 = vshrl.u32 %v2531, 7
  %v2533 = vsub.s32 0, %v2532
  %v2534 = vrot.slane %v2475, %v2533
  %v2536 = vmul.f32 %v2526, %v2534
  %v2537 = vmul.f32 %v2527, %v2534
  %v2538 = vmul.f32 %v2528, %v2534
  %v2539 = vmul.f32 %v2529, %v2534
  %v2541 = vlaneseq
  %v2542 = vshrl.u32 %v2541, 7
  %v2543 = vsub.s32 0, %v2542
  %v2544 = vrot.slane %v2477, %v2543
  %v2546 = vadd.f32 %v2536, %v2544
  %v2547 = vadd.f32 %v2537, %v2544
  %v2548 = vadd.f32 %v2538, %v2544
  %v2549 = vadd.f32 %v2539, %v2544
  %v2550 = vld [vmem:[%s14] sm:$0xff]
  %v2551 = vld [vmem:[%s14 + $0x8] sm:$0xff]
  %v2552 = vld [vmem:[%s14 + $0x10] sm:$0xff]
  %v2553 = vld [vmem:[%s14 + $0x18] sm:$0xff]
  %v2554 = vld [vmem:[%s14 + $0x20] sm:$0xff]
  %v2555 = vld [vmem:[%s14 + $0x28] sm:$0xff]
  %v2556 = vld [vmem:[%s14 + $0x30] sm:$0xff]
  %v2557 = vld [vmem:[%s14 + $0x38] sm:$0xff]
  %v2558 = vld [vmem:[%s15] sm:$0x3]
  %v2560 = vlaneseq
  %v2561 = vshrl.u32 %v2560, 7
  %v2562 = vsub.s32 0, %v2561
  %v2563 = vrot.slane %v2558, %v2562
  %v2564 = vlaneseq
  %v2565 = vshrl.u32 %v2564, 7
  %v2566 = vsub.s32 1, %v2565
  %v2567 = vrot.slane %v2558, %v2566
  %v2571 = vsel %vm72, %v2546, 0
  %v2574 = vsel %vm72, %v2547, 0
  %v2577 = vsel %vm72, %v2548, 0
  %v2580 = vsel %vm72, %v2549, 0
  %2582 = vmatprep.subr.mxu0 0.0
  %2583 = vmatpush1.msra.mxu0 0.0
  %2584 = vmatprep.subr.mxu0 0.0
  %2585 = vmatpush1.msra.mxu0 0.0
  %2586 = vmatprep.subr.mxu0 0.0
  %2587 = vmatpush1.msra.mxu0 0.0
  %2588 = vmatprep.subr.mxu0 0.0
  %2589 = vmatpush1.msra.mxu0 0.0
  %2590 = vmatprep.subr.mxu0 0.0
  %2591 = vmatpush1.msra.mxu0 0.0
  %2592 = vmatprep.subr.mxu0 0.0
  %2593 = vmatpush1.msra.mxu0 0.0
  %2594 = vmatprep.subr.mxu0 0.0
  %2595 = vmatpush1.msra.mxu0 0.0
  %2596 = vmatprep.subr.mxu0 0.0
  %2597 = vmatpush1.msra.mxu0 0.0
  %2598 = vmatprep.subr.mxu0 0.0
  %2599 = vmatpush1.msra.mxu0 0.0
  %2600 = vmatprep.subr.mxu0 0.0
  %2601 = vmatpush1.msra.mxu0 0.0
  %2602 = vmatprep.subr.mxu0 0.0
  %2603 = vmatpush1.msra.mxu0 0.0
  %2604 = vmatprep.subr.mxu0 0.0
  %2605 = vmatpush1.msra.mxu0 0.0
  %2606 = vmatprep.subr.mxu0 %v2557
  %2607 = vmatpush1.msra.mxu0 %v2556
  %2608 = vmatprep.subr.mxu0 %v2555
  %2609 = vmatpush1.msra.mxu0 %v2554
  %2610 = vmatprep.subr.mxu0 %v2553
  %2611 = vmatpush1.msra.mxu0 %v2552
  %2612 = vmatprep.subr.mxu0 %v2551
  %2613 = vmatpush1.msra.mxu0 %v2550
  %2614 = vmatprep.subr.mxu0 0.0
  %2615 = vmatpush2.msra.mxu0 0.0
  %2616 = vmatprep.subr.mxu0 0.0
  %2617 = vmatpush2.msra.mxu0 0.0
  %2618 = vmatprep.subr.mxu0 0.0
  %2619 = vmatpush2.msra.mxu0 0.0
  %2620 = vmatprep.subr.mxu0 0.0
  %2621 = vmatpush2.msra.mxu0 0.0
  %2622 = vmatprep.subr.mxu0 0.0
  %2623 = vmatpush2.msra.mxu0 0.0
  %2624 = vmatprep.subr.mxu0 0.0
  %2625 = vmatpush2.msra.mxu0 0.0
  %2626 = vmatprep.subr.mxu0 0.0
  %2627 = vmatpush2.msra.mxu0 0.0
  %2628 = vmatprep.subr.mxu0 0.0
  %2629 = vmatpush2.msra.mxu0 0.0
  %2630 = vmatprep.subr.mxu0 0.0
  %2631 = vmatpush2.msra.mxu0 0.0
  %2632 = vmatprep.subr.mxu0 0.0
  %2633 = vmatpush2.msra.mxu0 0.0
  %2634 = vmatprep.subr.mxu0 0.0
  %2635 = vmatpush2.msra.mxu0 0.0
  %2636 = vmatprep.subr.mxu0 0.0
  %2637 = vmatpush2.msra.mxu0 0.0
  %2638 = vmatprep.subr.mxu0 0.0
  %2639 = vmatpush2.msra.mxu0 0.0
  %2640 = vmatprep.subr.mxu0 0.0
  %2641 = vmatpush2.msra.mxu0 0.0
  %2642 = vmatprep.subr.mxu0 0.0
  %2643 = vmatpush2.msra.mxu0 0.0
  %2644 = vmatprep.subr.mxu0 0.0
  %2645 = vmatpush2.msra.mxu0 0.0
  %2646 = vmatprep.mubr.f32.mxu0 0.0
  %2647 = vmatmul.mubr.f32.gmra.mxu0 %v2571
  %v2648 = vpop.f32.mrf.mxu0
  %v2649 = vadd.f32 %v2563, %v2648
  %v2650 = vpop.f32.mrf.mxu0
  %v2651 = vadd.f32 %v2567, %v2650
  %2652 = vmatprep.mubr.f32.mxu0 0.0
  %2653 = vmatmul.mubr.f32.gmra.mxu0 %v2574
  %v2654 = vpop.f32.mrf.mxu0
  %v2655 = vadd.f32 %v2563, %v2654
  %v2656 = vpop.f32.mrf.mxu0
  %v2657 = vadd.f32 %v2567, %v2656
  %2658 = vmatprep.mubr.f32.mxu0 0.0
  %2659 = vmatmul.mubr.f32.gmra.mxu0 %v2577
  %v2660 = vpop.f32.mrf.mxu0
  %v2661 = vadd.f32 %v2563, %v2660
  %v2662 = vpop.f32.mrf.mxu0
  %v2663 = vadd.f32 %v2567, %v2662
  %2664 = vmatprep.mubr.f32.mxu0 0.0
  %2665 = vmatmul.mubr.f32.gmra.mxu0 %v2580
  %v2666 = vpop.f32.mrf.mxu0
  %v2667 = vadd.f32 %v2563, %v2666
  %v2668 = vpop.f32.mrf.mxu0
  %v2669 = vadd.f32 %v2567, %v2668
  %2670 = vdwg.mxu0
  %2671 = vst [vmem:[%s16] sm:$0xff] %v2649
  %2672 = vst [vmem:[%s16 + $0x8] sm:$0xff] %v2651
  %2673 = vst [vmem:[%s16 + $0x10] sm:$0xff] %v2655
  %2674 = vst [vmem:[%s16 + $0x18] sm:$0xff] %v2657
  %2675 = vst [vmem:[%s16 + $0x20] sm:$0xff] %v2661
  %2676 = vst [vmem:[%s16 + $0x28] sm:$0xff] %v2663
  %2677 = vst [vmem:[%s16 + $0x30] sm:$0xff] %v2667
  %2678 = vst [vmem:[%s16 + $0x38] sm:$0xff] %v2669
  // Predicated region
  $region66: #{transformer_forward.1} parent=0 // pred_check
    _
  $region67: #{transformer_forward.1} parent=0 // pred_check_branch
    %2680 = sbr.rel (0) target = $region69
  $region68: #{transformer_forward.1} parent=0 // pred_region
    _
  $region69: #{transformer_forward.1} parent=0 // pred_fallthru
    _
  // Predicated region
  $region70: #{transformer_forward.1} parent=0 // pred_check
    _
  $region71: #{transformer_forward.1} parent=0 // pred_check_branch
    %2682 = sbr.rel (0) target = $region73
  $region72: #{transformer_forward.1} parent=0 // pred_region
    _
  $region73: #{transformer_forward.1} parent=0 // pred_fallthru
    _

</llo_original>
